<compile_context>
chip_gen: v7x
topology: tpu7x:2x2x1
jax: 0.10.0
libtpu: 0.0.40
codegen_flags: <defaults>
</compile_context>

<pallas_src>
import functools

import jax
import jax.numpy as jnp
from jax import lax
from jax.experimental import pallas as pl
from jax.experimental.pallas import tpu as pltpu


def _vmem_budget_bytes():
    """Physical VMEM per core (fallback: assume 64 MiB, the smallest current generation)."""
    try:
        info = pltpu.get_tpu_info()
        return int(getattr(info, "vmem_capacity_bytes"))
    except Exception:
        return 64 * 1024 * 1024


def _conv_taps(x_ref, w_ref, acc_ref, *, row0, Twide, Wrow):
    """3 accumulating MXU matmuls (one per kh tap, kw folded into K) into the f32 scratch.

    x_ref:   (1, Lpad, 3*C_in)  bf16  width-3 im2col, flattened (row, col) row-major
    w_ref:   (3, 3*C_in, C_out) bf16  one (3*C_in, C_out) matrix per kh tap
    acc_ref: (Twide, C_out)     f32   VMEM scratch accumulator
    """
    for kh in range(3):
        start = (row0 + kh) * Wrow
        if not isinstance(start, int):
            # Wrow % 8 == 0, so every tap window start is sublane-aligned.
            start = pl.multiple_of(start, 8)
        xs = x_ref[0, pl.ds(start, Twide), :]             # (Twide, 3*C_in) bf16
        d = jnp.dot(xs, w_ref[kh], preferred_element_type=jnp.float32)
        if kh == 0:
            acc_ref[...] = d
        else:
            acc_ref[...] += d


def _conv_norm_relu_kernel(x_ref, w_ref, o_ref, acc_ref, *, H, Wrow, inv_count, eps, use_act):
    """Fused single-pass path (whole per-image output fits VMEM): conv + IN + ReLU."""
    Twide = H * Wrow
    _conv_taps(x_ref, w_ref, acc_ref, row0=0, Twide=Twide, Wrow=Wrow)
    acc = acc_ref[...]                                     # (Twide, C_out) f32
    # Pad columns of the im2col are zero -> conv output there is exactly 0, so plain sums
    # over the whole tile equal sums over the H*W valid pixels (no mask needed).
    mean = jnp.sum(acc, axis=0, keepdims=True) * inv_count
    ex2 = jnp.sum(acc * acc, axis=0, keepdims=True) * inv_count
    var = jnp.maximum(ex2 - mean * mean, 0.0)              # clamp f32 cancellation
    inv_std = lax.rsqrt(var + eps)                         # EUP
    out = (acc - mean) * inv_std
    if use_act:
        out = jnp.maximum(out, 0.0)
    o_ref[0] = out.astype(o_ref.dtype)


def _conv_stats_kernel(x_ref, w_ref, y_ref, stats_ref, acc_ref, *, row_tile, Wrow):
    """Two-pass path, pass 1: conv for one row-tile + running per-channel [sum, sum_sq]."""
    t = pl.program_id(1)
    Twide = row_tile * Wrow
    row0 = t * row_tile
    _conv_taps(x_ref, w_ref, acc_ref, row0=row0, Twide=Twide, Wrow=Wrow)

    acc = acc_ref[...]                                     # (Twide, C_out) f32
    # bf16 intermediate: stats come from the f32 accumulator, so the cast only touches
    # the normalized values, not mean/var.
    y_ref[0] = acc.astype(y_ref.dtype)

    s = jnp.sum(acc, axis=0, keepdims=True)                # (1, C_out) sum
    ss = jnp.sum(acc * acc, axis=0, keepdims=True)         # (1, C_out) sum of squares
    part = jnp.concatenate([s, ss], axis=0)                # (2, C_out)

    @pl.when(t == 0)
    def _():
        stats_ref[0] = part

    @pl.when(t > 0)
    def _():
        stats_ref[0] = stats_ref[0] + part


def _norm_relu_kernel(y_ref, stats_ref, o_ref, *, inv_count, eps, use_act):
    """Two-pass path, pass 2: InstanceNorm (affine=False) + optional ReLU per row-tile."""
    y = y_ref[0].astype(jnp.float32)                       # (Twide, C_out)
    mean = stats_ref[0, 0:1, :] * inv_count                # (1, C_out)
    ex2 = stats_ref[0, 1:2, :] * inv_count
    var = jnp.maximum(ex2 - mean * mean, 0.0)
    inv_std = lax.rsqrt(var + eps)
    out = (y - mean) * inv_std
    if use_act:
        out = jnp.maximum(out, 0.0)
    o_ref[0] = out.astype(o_ref.dtype)


def conv_block(x, weight, bias=None, *, use_act=True, eps=1e-5, row_tile=None):
    """Fused Conv2d(3x3, stride 1, reflect pad 1) + InstanceNorm2d(affine=False) + ReLU.

    x: (N, C_in, H, W); weight: (C_out, C_in, 3, 3).
    bias is accepted but unused: a per-channel conv bias cancels exactly under
    InstanceNorm2d(affine=False) (the PyTorch default in this ConvBlock).
    """
    del bias
    N, C_in, H, W = x.shape
    C_out, C_in_w, kH, kW = weight.shape
    assert (C_in_w, kH, kW) == (C_in, 3, 3), "only 3x3 stride-1 reflect-pad conv supported"

    Wrow = ((W + 7) // 8) * 8          # pad row width -> all tap starts sublane-aligned
    Kdim = 3 * C_in                    # kw folded into the matmul K dim
    P = H * W                          # InstanceNorm pixel count (valid pixels only)

    vmem = _vmem_budget_bytes()
    # Bigger wide tiles on 128 MiB chips (v5e/v6e); tighter on v7x (64 MiB).
    twide_cap = 8192 if vmem >= 100 * 1024 * 1024 else 4096
    vmem_limit = int(min(0.75 * vmem, 100 * 1024 * 1024))

    if row_tile is None:
        cands = [th for th in range(1, H + 1) if H % th == 0 and th * Wrow <= twide_cap]
        row_tile = max(cands) if cands else 1
    assert H % row_tile == 0
    n_tiles = H // row_tile
    Twide = row_tile * Wrow
    Lpad = (H + 2) * Wrow              # last tap window of the last tile ends exactly here

    # ---- host-side glue: layout only ----
    x_pad = jnp.pad(x, ((0, 0), (0, 0), (1, 1), (1, 1)), mode="reflect")
    x_nhwc = x_pad.transpose(0, 2, 3, 1)                                # (N, H+2, W+2, C_in)
    # width-3 im2col: x3[n, h, w, kw*C_in + ci] = x_pad[n, ci, h+?, w+kw]  (3x input, not 9x)
    x3 = jnp.concatenate([x_nhwc[:, :, kw:kw + W, :] for kw in range(3)], axis=-1)
    if Wrow > W:
        x3 = jnp.pad(x3, ((0, 0), (0, 0), (0, Wrow - W), (0, 0)))       # zero cols -> conv=0
    x_flat = x3.reshape(N, Lpad, Kdim).astype(jnp.bfloat16)

    # one (3*C_in, C_out) matrix per kh tap: w_taps[kh, kw*C_in+ci, co] = weight[co, ci, kh, kw]
    w_taps = weight.transpose(2, 3, 1, 0).reshape(3, Kdim, C_out).astype(jnp.bfloat16)

    if n_tiles == 1:
        # ---- fused single-pass path: conv + InstanceNorm + ReLU, no HBM intermediate ----
        kernel = functools.partial(_conv_norm_relu_kernel, H=H, Wrow=Wrow,
                                   inv_count=1.0 / P, eps=eps, use_act=use_act)
        out_wide = pl.pallas_call(
            kernel,
            out_shape=jax.ShapeDtypeStruct((N, H * Wrow, C_out), jnp.float32),
            grid_spec=pltpu.PrefetchScalarGridSpec(
                num_scalar_prefetch=0,
                grid=(N,),
                in_specs=[
                    pl.BlockSpec((1, Lpad, Kdim), lambda n: (n, 0, 0)),
                    pl.BlockSpec((3, Kdim, C_out), lambda n: (0, 0, 0)),
                ],
                out_specs=pl.BlockSpec((1, H * Wrow, C_out), lambda n: (n, 0, 0)),
                scratch_shapes=[pltpu.VMEM((H * Wrow, C_out), jnp.float32)],
            ),
            compiler_params=pltpu.CompilerParams(
                dimension_semantics=("parallel",),
                vmem_limit_bytes=vmem_limit,
            ),
        )(x_flat, w_taps)
    else:
        # ---- pass 1: conv (3 tap matmuls, K=3*C_in) + per-channel sum / sum_sq ----
        conv_kernel = functools.partial(_conv_stats_kernel, row_tile=row_tile, Wrow=Wrow)
        y_wide, stats = pl.pallas_call(
            conv_kernel,
            out_shape=(
                jax.ShapeDtypeStruct((N, H * Wrow, C_out), jnp.bfloat16),   # bf16 intermediate
                jax.ShapeDtypeStruct((N, 2, C_out), jnp.float32),
            ),
            grid_spec=pltpu.PrefetchScalarGridSpec(
                num_scalar_prefetch=0,
                grid=(N, n_tiles),
                in_specs=[
                    # full padded im2col resident per n (re-DMA'd only when n changes)
                    pl.BlockSpec((1, Lpad, Kdim), lambda n, t: (n, 0, 0)),
                    pl.BlockSpec((3, Kdim, C_out), lambda n, t: (0, 0, 0)),
                ],
                out_specs=[
                    pl.BlockSpec((1, Twide, C_out), lambda n, t: (n, t, 0)),
                    pl.BlockSpec((1, 2, C_out), lambda n, t: (n, 0, 0)),    # accumulated over t
                ],
                scratch_shapes=[pltpu.VMEM((Twide, C_out), jnp.float32)],
            ),
            compiler_params=pltpu.CompilerParams(
                dimension_semantics=("parallel", "arbitrary"),
                vmem_limit_bytes=vmem_limit,
            ),
        )(x_flat, w_taps)

        # ---- pass 2: normalize (+ ReLU) each tile with the finished per-image stats ----
        norm_kernel = functools.partial(_norm_relu_kernel, inv_count=1.0 / P, eps=eps,
                                        use_act=use_act)
        out_wide = pl.pallas_call(
            norm_kernel,
            out_shape=jax.ShapeDtypeStruct((N, H * Wrow, C_out), jnp.float32),
            grid_spec=pltpu.PrefetchScalarGridSpec(
                num_scalar_prefetch=0,
                grid=(N, n_tiles),
                in_specs=[
                    pl.BlockSpec((1, Twide, C_out), lambda n, t: (n, t, 0)),
                    pl.BlockSpec((1, 2, C_out), lambda n, t: (n, 0, 0)),
                ],
                out_specs=pl.BlockSpec((1, Twide, C_out), lambda n, t: (n, t, 0)),
            ),
            compiler_params=pltpu.CompilerParams(
                dimension_semantics=("parallel", "parallel"),
                vmem_limit_bytes=vmem_limit,
            ),
        )(y_wide, stats)

    out = out_wide.reshape(N, H, Wrow, C_out)
    if Wrow > W:
        out = out[:, :, :W, :]
    return out.transpose(0, 3, 1, 2)


def conv_block_reference(x, weight, bias, *, use_act=True, eps=1e-5):
    """Pure-JAX reference mirroring the PyTorch module."""
    x_pad = jnp.pad(x, ((0, 0), (0, 0), (1, 1), (1, 1)), mode="reflect")
    y = lax.conv_general_dilated(
        x_pad, weight, window_strides=(1, 1), padding="VALID",
        dimension_numbers=("NCHW", "OIHW", "NCHW"),
    ) + bias[None, :, None, None]
    mean = jnp.mean(y, axis=(2, 3), keepdims=True)
    var = jnp.mean((y - mean) ** 2, axis=(2, 3), keepdims=True)
    y = (y - mean) * lax.rsqrt(var + eps)
    if use_act:
        y = jnp.maximum(y, 0.0)
    return y


if __name__ == "__main__":
    # Small shapes consistent with the module.
    N, C_in, C_out, H, W = 2, 4, 8, 16, 16

    key = jax.random.PRNGKey(0)
    kx, kw_, kb = jax.random.split(key, 3)
    x = jax.random.normal(kx, (N, C_in, H, W), dtype=jnp.float32)
    fan_in = C_in * 3 * 3
    weight = jax.random.normal(kw_, (C_out, C_in, 3, 3), dtype=jnp.float32) / jnp.sqrt(fan_in)
    bias = jax.random.normal(kb, (C_out,), dtype=jnp.float32) * 0.1

    # Reference at the kernel's operand precision (bf16 operands, f32 accumulation).
    xb = x.astype(jnp.bfloat16).astype(jnp.float32)
    wb = weight.astype(jnp.bfloat16).astype(jnp.float32)
    ref_act = conv_block_reference(xb, wb, bias, use_act=True)

    # Fused single-pass path (n_tiles == 1): f32 accumulation end-to-end.
    out_fused = jax.block_until_ready(conv_block(x, weight, bias, use_act=True))
    assert out_fused.shape == (N, C_out, H, W)
    err_f = float(jnp.max(jnp.abs(out_fused - ref_act)))
    assert jnp.allclose(out_fused, ref_act, atol=2e-3, rtol=2e-3), err_f

    # Two-pass path (row_tile=8 -> 2 tiles/image): bf16 intermediate + cross-tile stats
    # accumulation; looser tolerance reflects the intentional bf16 rounding of y.
    out_2p = jax.block_until_ready(conv_block(x, weight, bias, use_act=True, row_tile=8))
    err_2 = float(jnp.max(jnp.abs(out_2p - ref_act)))
    assert jnp.allclose(out_2p, ref_act, atol=3e-2, rtol=3e-2), err_2

    # use_act=False (Identity) path.
    ref_id = conv_block_reference(xb, wb, bias, use_act=False)
    out_id = jax.block_until_ready(conv_block(x, weight, bias, use_act=False))
    err_i = float(jnp.max(jnp.abs(out_id - ref_id)))
    assert jnp.allclose(out_id, ref_id, atol=2e-3, rtol=2e-3), err_i

    print("KERNEL_OK")
</pallas_src>

<mosaic_0001>
module attributes {stable_mosaic.version = 11 : i64} {
  func.func @_conv_norm_relu_kernel(%arg0: i32, %arg1: memref<1x288x12xbf16, #tpu.memory_space<vmem>>, %arg2: memref<3x12x8xbf16, #tpu.memory_space<vmem>>, %arg3: memref<1x256x8xf32, #tpu.memory_space<vmem>>, %arg4: memref<256x8xf32, #tpu.memory_space<vmem>>) attributes {dimension_semantics = [#tpu.dimension_semantics<parallel>], iteration_bounds = array<i64: 2>, scalar_prefetch = 0 : i64, scratch_operands = 1 : i64, tpu.core_type = #tpu.core_type<tc>, window_params = [{transform_indices = @transform_0, window_bounds = array<i64: 1, 288, 12>}, {pipeline_mode = #tpu.pipeline_mode<synchronous>, transform_indices = @transform_1, window_bounds = array<i64: 3, 12, 8>}, {transform_indices = @transform_2, window_bounds = array<i64: 1, 256, 8>}]} {
    %c0 = arith.constant 0 : index
    %c0_0 = arith.constant 0 : index
    %c0_1 = arith.constant 0 : index
    %0 = vector.load %arg1[%c0, %c0_0, %c0_1] : memref<1x288x12xbf16, #tpu.memory_space<vmem>>, vector<1x256x12xbf16>
    %1 = vector.shape_cast %0 : vector<1x256x12xbf16> to vector<256x12xbf16>
    %c0_2 = arith.constant 0 : index
    %c0_3 = arith.constant 0 : index
    %c0_4 = arith.constant 0 : index
    %2 = vector.load %arg2[%c0_2, %c0_3, %c0_4] : memref<3x12x8xbf16, #tpu.memory_space<vmem>>, vector<1x12x8xbf16>
    %3 = vector.shape_cast %2 : vector<1x12x8xbf16> to vector<12x8xbf16>
    %cst = arith.constant dense<0.000000e+00> : vector<256x8xf32>
    %4 = tpu.matmul %1, %3, %cst {dimension_numbers = #tpu.dot_dimension_numbers<[1], [0], [0], [1], [0, 0, 1, 1], [], []>} : vector<256x12xbf16>, vector<12x8xbf16>, vector<256x8xf32> -> vector<256x8xf32>
    %c0_5 = arith.constant 0 : index
    %c0_6 = arith.constant 0 : index
    %5 = vector.load %arg4[%c0_5, %c0_6] : memref<256x8xf32, #tpu.memory_space<vmem>>, vector<256x8xf32>
    tpu.vector_store %arg4[%c0_5, %c0_6], %4 {strides = array<i32>} : memref<256x8xf32, #tpu.memory_space<vmem>>, vector<256x8xf32>,
    %c0_7 = arith.constant 0 : index
    %c16 = arith.constant 16 : index
    %c0_8 = arith.constant 0 : index
    %6 = vector.load %arg1[%c0_7, %c16, %c0_8] : memref<1x288x12xbf16, #tpu.memory_space<vmem>>, vector<1x256x12xbf16>
    %7 = vector.shape_cast %6 : vector<1x256x12xbf16> to vector<256x12xbf16>
    %c1 = arith.constant 1 : index
    %c0_9 = arith.constant 0 : index
    %c0_10 = arith.constant 0 : index
    %8 = vector.load %arg2[%c1, %c0_9, %c0_10] : memref<3x12x8xbf16, #tpu.memory_space<vmem>>, vector<1x12x8xbf16>
    %9 = vector.shape_cast %8 : vector<1x12x8xbf16> to vector<12x8xbf16>
    %cst_11 = arith.constant dense<0.000000e+00> : vector<256x8xf32>
    %10 = tpu.matmul %7, %9, %cst_11 {dimension_numbers = #tpu.dot_dimension_numbers<[1], [0], [0], [1], [0, 0, 1, 1], [], []>} : vector<256x12xbf16>, vector<12x8xbf16>, vector<256x8xf32> -> vector<256x8xf32>
    %c0_12 = arith.constant 0 : index
    %c0_13 = arith.constant 0 : index
    %11 = vector.load %arg4[%c0_12, %c0_13] : memref<256x8xf32, #tpu.memory_space<vmem>>, vector<256x8xf32>
    %12 = arith.addf %11, %10 : vector<256x8xf32>
    %c0_14 = arith.constant 0 : index
    %c0_15 = arith.constant 0 : index
    %13 = vector.load %arg4[%c0_14, %c0_15] : memref<256x8xf32, #tpu.memory_space<vmem>>, vector<256x8xf32>
    tpu.vector_store %arg4[%c0_14, %c0_15], %12 {strides = array<i32>} : memref<256x8xf32, #tpu.memory_space<vmem>>, vector<256x8xf32>,
    %c0_16 = arith.constant 0 : index
    %c32 = arith.constant 32 : index
    %c0_17 = arith.constant 0 : index
    %14 = vector.load %arg1[%c0_16, %c32, %c0_17] : memref<1x288x12xbf16, #tpu.memory_space<vmem>>, vector<1x256x12xbf16>
    %15 = vector.shape_cast %14 : vector<1x256x12xbf16> to vector<256x12xbf16>
    %c2 = arith.constant 2 : index
    %c0_18 = arith.constant 0 : index
    %c0_19 = arith.constant 0 : index
    %16 = vector.load %arg2[%c2, %c0_18, %c0_19] : memref<3x12x8xbf16, #tpu.memory_space<vmem>>, vector<1x12x8xbf16>
    %17 = vector.shape_cast %16 : vector<1x12x8xbf16> to vector<12x8xbf16>
    %cst_20 = arith.constant dense<0.000000e+00> : vector<256x8xf32>
    %18 = tpu.matmul %15, %17, %cst_20 {dimension_numbers = #tpu.dot_dimension_numbers<[1], [0], [0], [1], [0, 0, 1, 1], [], []>} : vector<256x12xbf16>, vector<12x8xbf16>, vector<256x8xf32> -> vector<256x8xf32>
    %c0_21 = arith.constant 0 : index
    %c0_22 = arith.constant 0 : index
    %19 = vector.load %arg4[%c0_21, %c0_22] : memref<256x8xf32, #tpu.memory_space<vmem>>, vector<256x8xf32>
    %20 = arith.addf %19, %18 : vector<256x8xf32>
    %c0_23 = arith.constant 0 : index
    %c0_24 = arith.constant 0 : index
    %21 = vector.load %arg4[%c0_23, %c0_24] : memref<256x8xf32, #tpu.memory_space<vmem>>, vector<256x8xf32>
    tpu.vector_store %arg4[%c0_23, %c0_24], %20 {strides = array<i32>} : memref<256x8xf32, #tpu.memory_space<vmem>>, vector<256x8xf32>,
    %c0_25 = arith.constant 0 : index
    %c0_26 = arith.constant 0 : index
    %22 = vector.load %arg4[%c0_25, %c0_26] : memref<256x8xf32, #tpu.memory_space<vmem>>, vector<256x8xf32>
    %cst_27 = arith.constant dense<0.000000e+00> : vector<8xf32>
    %23 = vector.multi_reduction <add>, %22, %cst_27 [0] : vector<256x8xf32> to vector<8xf32>
    %24 = vector.shape_cast %23 : vector<8xf32> to vector<1x8xf32>
    %cst_28 = arith.constant 3.906250e-03 : f32
    %25 = vector.broadcast %cst_28 : f32 to vector<1x8xf32>
    %26 = arith.mulf %24, %25 : vector<1x8xf32>
    %27 = arith.mulf %22, %22 : vector<256x8xf32>
    %cst_29 = arith.constant dense<0.000000e+00> : vector<8xf32>
    %28 = vector.multi_reduction <add>, %27, %cst_29 [0] : vector<256x8xf32> to vector<8xf32>
    %29 = vector.shape_cast %28 : vector<8xf32> to vector<1x8xf32>
    %cst_30 = arith.constant 3.906250e-03 : f32
    %30 = vector.broadcast %cst_30 : f32 to vector<1x8xf32>
    %31 = arith.mulf %29, %30 : vector<1x8xf32>
    %32 = arith.mulf %26, %26 : vector<1x8xf32>
    %33 = arith.subf %31, %32 : vector<1x8xf32>
    %cst_31 = arith.constant 0.000000e+00 : f32
    %34 = vector.broadcast %cst_31 : f32 to vector<1x8xf32>
    %35 = arith.maximumf %33, %34 : vector<1x8xf32>
    %cst_32 = arith.constant 9.99999974E-6 : f32
    %36 = vector.broadcast %cst_32 : f32 to vector<1x8xf32>
    %37 = arith.addf %35, %36 : vector<1x8xf32>
    %38 = math.rsqrt %37 : vector<1x8xf32>
    %39 = vector.broadcast %26 : vector<1x8xf32> to vector<256x8xf32>
    %40 = arith.subf %22, %39 : vector<256x8xf32>
    %41 = vector.broadcast %38 : vector<1x8xf32> to vector<256x8xf32>
    %42 = arith.mulf %40, %41 : vector<256x8xf32>
    %cst_33 = arith.constant 0.000000e+00 : f32
    %43 = vector.broadcast %cst_33 : f32 to vector<256x8xf32>
    %44 = arith.maximumf %42, %43 : vector<256x8xf32>
    %c0_34 = arith.constant 0 : index
    %c0_35 = arith.constant 0 : index
    %c0_36 = arith.constant 0 : index
    %45 = vector.load %arg3[%c0_34, %c0_35, %c0_36] : memref<1x256x8xf32, #tpu.memory_space<vmem>>, vector<1x256x8xf32>
    %46 = vector.shape_cast %45 : vector<1x256x8xf32> to vector<256x8xf32>
    %47 = vector.shape_cast %44 : vector<256x8xf32> to vector<1x256x8xf32>
    tpu.vector_store %arg3[%c0_34, %c0_35, %c0_36], %47 {strides = array<i32>} : memref<1x256x8xf32, #tpu.memory_space<vmem>>, vector<1x256x8xf32>,
    return
  }
  func.func @transform_0(%arg0: i32) -> (i32, i32, i32) {
    %c0_i32 = arith.constant 0 : i32
    %c0_i32_0 = arith.constant 0 : i32
    %c0_i32_1 = arith.constant 0 : i32
    return %arg0, %c0_i32, %c0_i32_0 : i32, i32, i32
  }
  func.func @transform_1(%arg0: i32) -> (i32, i32, i32) {
    %c0_i32 = arith.constant 0 : i32
    %c0_i32_0 = arith.constant 0 : i32
    %c0_i32_1 = arith.constant 0 : i32
    %c0_i32_2 = arith.constant 0 : i32
    return %c0_i32, %c0_i32_0, %c0_i32_1 : i32, i32, i32
  }
  func.func @transform_2(%arg0: i32) -> (i32, i32, i32) {
    %c0_i32 = arith.constant 0 : i32
    %c0_i32_0 = arith.constant 0 : i32
    %c0_i32_1 = arith.constant 0 : i32
    return %arg0, %c0_i32, %c0_i32_0 : i32, i32, i32
  }
}

</mosaic_0001>

<llo_original>
// kernel: tpu_custom_call.1
$region0: #{tpu_custom_call.1}
  #allocation0 [shape = 'u32[]', space=smem, size = 0x4, offset = 0x4, fixed_abs, tag = 'smem constant byte address 0x4 - core index']
  #allocation1 [shape = 'u32[144,128]{1,0:T(1,128)}', space=vmem, size = 0x12000, scoped, tag = 'internal scratch']
  #allocation2 [shape = 'f32[256,8]{1,0:T(8,128)}', space=vmem, size = 0x20000, scoped, tag = 'scratch operand']
  %s0 = inlined_call_operand.vmem [shape: bf16[2,288,12], index: 0, kind: input, shape index: {}]
  %s1 = inlined_call_operand.vmem [shape: bf16[3,12,8], index: 1, kind: input, shape index: {}]
  %s2 = inlined_call_operand.vmem [shape: f32[2,256,8], index: 2, kind: output, shape index: {}]
  %s3 = sld [smem:[#allocation0]]
  $region41: #{tpu_custom_call.1} parent=0
    _
  %s5 = ssub.s32 1, %s3
  %s6 = scalar_select 0, %s5, %s3
  loop: start=0, step=1, limit=4
  $region2: #{tpu_custom_call.1} parent=0 // loop_pre_header
    _
  $region3: #{tpu_custom_call.1} parent=0 // loop_header
    %s8 = sphi 0, %s12
    %p9 = scmp.ge.s32.totalorder %s8, 4
    %s18 = sphi 0, %s20
    %s21 = sphi 0, %s18
    %s22 = sphi 0, %s21
    %s38 = sphi 0, %s22
    %s42 = sphi 0, %s42
    %s44 = sphi 0, %s42
    %s45 = sphi 0, %s44
    %s59 = sphi 0, %s45
    %s65 = sphi 0, %s67
    %s68 = sphi 0, %s65
    %s69 = sphi 0, %s68
    %s85 = sphi 0, %s69
  $region4: #{tpu_custom_call.1} parent=0 // loop_header_branch
    %11 = sbr.rel (%p9) target = $region8
  $region5: #{tpu_custom_call.1} parent=0 // loop_body
    %s13 = ssub.s32 %s8, 1
    %s14 = ssub.s32 %s8, 2
    %s15 = sadd.s32 %s8, 1
    %s16 = ssub.s32 %s8, %s15
    %p17 = scmp.eq.s32.totalorder %s16, 0
    %s19 = sadd.s32 %s18, 1
    %s20 = scalar_select %p17, %s18, %s19
    %p23 = pneg %p17
    %p24 = scmp.eq.s32.totalorder %s8, 1
    %p25 = por %p23, %p24
    %p26 = scmp.ne.s32.totalorder %s18, %s21
    %p27 = scmp.eq.s32.totalorder %s8, 0
    %p28 = por %p26, %p27
    %p29 = scmp.ne.s32.totalorder %s18, %s21
    %p30 = scmp.eq.s32.totalorder %s13, 1
    %p31 = por %p29, %p30
    %p32 = scmp.ne.s32.totalorder %s21, %s22
    %p33 = scmp.eq.s32.totalorder %s13, 0
    %p34 = por %p32, %p33
    %p35 = scmp.ne.s32.totalorder %s21, %s22
    %p36 = scmp.eq.s32.totalorder %s14, 1
    %p37 = por %p35, %p36
    %p39 = scmp.ne.s32.totalorder %s22, %s38
    %p40 = scmp.eq.s32.totalorder %s14, 0
    %p41 = por %p39, %p40
    %s43 = sadd.s32 %s42, 1
    %p46 = scmp.eq.s32.totalorder %s8, 1
    %p47 = scmp.ne.s32.totalorder %s42, %s44
    %p48 = scmp.eq.s32.totalorder %s8, 0
    %p49 = por %p47, %p48
    %p50 = scmp.ne.s32.totalorder %s42, %s44
    %p51 = scmp.eq.s32.totalorder %s13, 1
    %p52 = por %p50, %p51
    %p53 = scmp.ne.s32.totalorder %s44, %s45
    %p54 = scmp.eq.s32.totalorder %s13, 0
    %p55 = por %p53, %p54
    %p56 = scmp.ne.s32.totalorder %s44, %s45
    %p57 = scmp.eq.s32.totalorder %s14, 1
    %p58 = por %p56, %p57
    %p60 = scmp.ne.s32.totalorder %s45, %s59
    %p61 = scmp.eq.s32.totalorder %s14, 0
    %p62 = por %p60, %p61
    %s63 = ssub.s32 %s8, %s15
    %p64 = scmp.eq.s32.totalorder %s63, 0
    %s66 = sadd.s32 %s65, 1
    %s67 = scalar_select %p64, %s65, %s66
    %p70 = pneg %p64
    %p71 = scmp.eq.s32.totalorder %s8, 1
    %p72 = por %p70, %p71
    %p73 = scmp.ne.s32.totalorder %s65, %s68
    %p74 = scmp.eq.s32.totalorder %s8, 0
    %p75 = por %p73, %p74
    %p76 = scmp.ne.s32.totalorder %s65, %s68
    %p77 = scmp.eq.s32.totalorder %s13, 1
    %p78 = por %p76, %p77
    %p79 = scmp.ne.s32.totalorder %s68, %s69
    %p80 = scmp.eq.s32.totalorder %s13, 0
    %p81 = por %p79, %p80
    %p82 = scmp.ne.s32.totalorder %s68, %s69
    %p83 = scmp.eq.s32.totalorder %s14, 1
    %p84 = por %p82, %p83
    %p86 = scmp.ne.s32.totalorder %s69, %s85
    %p87 = scmp.eq.s32.totalorder %s14, 0
    %p88 = por %p86, %p87
    %p89 = scmp.le.s32.totalorder 1, %s8
    %p90 = scmp.lt.s32.totalorder %s8, 3
    %p91 = pnand %p89, %p90
    %p92 = pneg %p91
    // Predicated region
    $region9: #{tpu_custom_call.1} parent=5 // pred_check
      _
    $region10: #{tpu_custom_call.1} parent=5 // pred_check_branch
      %94 = sbr.rel (%p91) target = $region12
    $region11: #{tpu_custom_call.1} parent=5 // pred_region
      %s95 = ssub.s32 %s8, 1
      // Predicated region
      $region13: #{tpu_custom_call.1} parent=11 // pred_check
        %p96 = pneg %p55
      $region14: #{tpu_custom_call.1} parent=11 // pred_check_branch
        %98 = sbr.rel (%p96) target = $region16
      $region15: #{tpu_custom_call.1} parent=11 // pred_region
        _
      $region16: #{tpu_custom_call.1} parent=11 // pred_fallthru
        _
    $region12: #{tpu_custom_call.1} parent=5 // pred_fallthru
      _
    %p99 = scmp.lt.s32.totalorder %s8, 2
    // Predicated region
    $region17: #{tpu_custom_call.1} parent=5 // pred_check
      %p100 = pneg %p99
    $region18: #{tpu_custom_call.1} parent=5 // pred_check_branch
      %102 = sbr.rel (%p100) target = $region20
    $region19: #{tpu_custom_call.1} parent=5 // pred_region
      // Predicated region
      $region21: #{tpu_custom_call.1} parent=19 // pred_check
        %p103 = pneg %p28
      $region22: #{tpu_custom_call.1} parent=19 // pred_check_branch
        %105 = sbr.rel (%p103) target = $region24
      $region23: #{tpu_custom_call.1} parent=19 // pred_region
        %p106 = scmp.lt.s32.totalorder %s8, 1
        %s107 = scalar_select %p106, %s8, 1
        %s108 = smul.addr %s107, 36
        %s109 = smul.addr %s108, 4
        %s110 = scalar_lea.vmem %s0, %s109
      $region24: #{tpu_custom_call.1} parent=19 // pred_fallthru
        _
    $region20: #{tpu_custom_call.1} parent=5 // pred_fallthru
      _
    %p111 = scmp.le.s32.totalorder 1, %s8
    %p112 = scmp.lt.s32.totalorder %s8, 3
    %p113 = pnand %p111, %p112
    %p114 = pneg %p113
    // Predicated region
    $region25: #{tpu_custom_call.1} parent=5 // pred_check
      _
    $region26: #{tpu_custom_call.1} parent=5 // pred_check_branch
      %116 = sbr.rel (%p113) target = $region28
    $region27: #{tpu_custom_call.1} parent=5 // pred_region
      %s117 = ssub.s32 %s8, 1
      %p118 = scmp.lt.s32.totalorder %s13, 1
      %s119 = scalar_select %p118, %s13, 1
      %s120 = smul.addr %s119, 36
      %s121 = smul.addr %s120, 4
      %s122 = scalar_lea.vmem %s0, %s121
      %p123 = pneg %p34
      %p124 = pneg %p31
      %p125 = pneg %p55
      %p126 = pneg %p52
      %p127 = pneg %p81
      %p128 = pneg %p78
      %p129 = scmp.lt.s32.totalorder %s13, 1
      %s130 = scalar_select %p129, %s13, 1
      %s131 = smul.addr %s130, 32
      %s132 = smul.addr %s131, 8
      %s133 = scalar_lea.vmem %s2, %s132
      %p134 = scmp.lt.s32.totalorder %s13, 1
      %s135 = scalar_select %p134, %s13, 1
      %s136 = smul.addr %s135, 36
      %s137 = smul.addr %s136, 4
      %s138 = scalar_lea.vmem %s0, %s137
      %p139 = scmp.lt.s32.totalorder %s13, 1
      %s140 = scalar_select %p139, %s13, 1
      %s141 = smul.addr %s140, 32
      %s142 = smul.addr %s141, 8
      %s143 = scalar_lea.vmem %s2, %s142
      %v145 = vld [vmem:[%s138] sm:$0xf]
      %v146 = vld [vmem:[%s138 + $0x4] sm:$0xf]
      %v147 = vld [vmem:[%s138 + $0x8] sm:$0xf]
      %v148 = vld [vmem:[%s138 + $0xc] sm:$0xf]
      %v149 = vld [vmem:[%s138 + $0x10] sm:$0xf]
      %v150 = vld [vmem:[%s138 + $0x14] sm:$0xf]
      %v151 = vld [vmem:[%s138 + $0x18] sm:$0xf]
      %v152 = vld [vmem:[%s138 + $0x1c] sm:$0xf]
      %v153 = vld [vmem:[%s138 + $0x20] sm:$0xf]
      %v154 = vld [vmem:[%s138 + $0x24] sm:$0xf]
      %v155 = vld [vmem:[%s138 + $0x28] sm:$0xf]
      %v156 = vld [vmem:[%s138 + $0x2c] sm:$0xf]
      %v157 = vld [vmem:[%s138 + $0x30] sm:$0xf]
      %v158 = vld [vmem:[%s138 + $0x34] sm:$0xf]
      %v159 = vld [vmem:[%s138 + $0x38] sm:$0xf]
      %v160 = vld [vmem:[%s138 + $0x3c] sm:$0xf]
      %v161 = vld [vmem:[%s138 + $0x40] sm:$0xf]
      %v162 = vld [vmem:[%s138 + $0x44] sm:$0xf]
      %v163 = vld [vmem:[%s138 + $0x48] sm:$0xf]
      %v164 = vld [vmem:[%s138 + $0x4c] sm:$0xf]
      %v165 = vld [vmem:[%s138 + $0x50] sm:$0xf]
      %v166 = vld [vmem:[%s138 + $0x54] sm:$0xf]
      %v167 = vld [vmem:[%s138 + $0x58] sm:$0xf]
      %v168 = vld [vmem:[%s138 + $0x5c] sm:$0xf]
      %v169 = vld [vmem:[%s138 + $0x60] sm:$0xf]
      %v170 = vld [vmem:[%s138 + $0x64] sm:$0xf]
      %v171 = vld [vmem:[%s138 + $0x68] sm:$0xf]
      %v172 = vld [vmem:[%s138 + $0x6c] sm:$0xf]
      %v173 = vld [vmem:[%s138 + $0x70] sm:$0xf]
      %v174 = vld [vmem:[%s138 + $0x74] sm:$0xf]
      %v175 = vld [vmem:[%s138 + $0x78] sm:$0xf]
      %v176 = vld [vmem:[%s138 + $0x7c] sm:$0xf]
      %v177 = vld [vmem:[%s1] sm:$0xf]
      %v178 = vld [vmem:[%s1 + $0x4] sm:$0x3]
      %v211 = vunpack.c.l.b16 %v145
      %v212 = vunpack.c.l.b16 %v146
      %v213 = vunpack.c.l.b16 %v147
      %v214 = vunpack.c.l.b16 %v148
      %v215 = vunpack.c.l.b16 %v149
      %v216 = vunpack.c.l.b16 %v150
      %v217 = vunpack.c.l.b16 %v151
      %v218 = vunpack.c.l.b16 %v152
      %v219 = vunpack.c.l.b16 %v153
      %v220 = vunpack.c.l.b16 %v154
      %v221 = vunpack.c.l.b16 %v155
      %v222 = vunpack.c.l.b16 %v156
      %v223 = vunpack.c.l.b16 %v157
      %v224 = vunpack.c.l.b16 %v158
      %v225 = vunpack.c.l.b16 %v159
      %v226 = vunpack.c.l.b16 %v160
      %v227 = vunpack.c.l.b16 %v161
      %v228 = vunpack.c.l.b16 %v162
      %v229 = vunpack.c.l.b16 %v163
      %v230 = vunpack.c.l.b16 %v164
      %v231 = vunpack.c.l.b16 %v165
      %v232 = vunpack.c.l.b16 %v166
      %v233 = vunpack.c.l.b16 %v167
      %v234 = vunpack.c.l.b16 %v168
      %v235 = vunpack.c.l.b16 %v169
      %v236 = vunpack.c.l.b16 %v170
      %v237 = vunpack.c.l.b16 %v171
      %v238 = vunpack.c.l.b16 %v172
      %v239 = vunpack.c.l.b16 %v173
      %v240 = vunpack.c.l.b16 %v174
      %v241 = vunpack.c.l.b16 %v175
      %v242 = vunpack.c.l.b16 %v176
      %v243 = vpack.c.b16 %v212, %v211
      %v244 = vpack.c.b16 %v214, %v213
      %v245 = vpack.c.b16 %v216, %v215
      %v246 = vpack.c.b16 %v218, %v217
      %v247 = vpack.c.b16 %v220, %v219
      %v248 = vpack.c.b16 %v222, %v221
      %v249 = vpack.c.b16 %v224, %v223
      %v250 = vpack.c.b16 %v226, %v225
      %v251 = vpack.c.b16 %v228, %v227
      %v252 = vpack.c.b16 %v230, %v229
      %v253 = vpack.c.b16 %v232, %v231
      %v254 = vpack.c.b16 %v234, %v233
      %v255 = vpack.c.b16 %v236, %v235
      %v256 = vpack.c.b16 %v238, %v237
      %v257 = vpack.c.b16 %v240, %v239
      %v258 = vpack.c.b16 %v242, %v241
      %v261 = vunpack.c.l.b16 %v177
      %v262 = vunpack.c.l.b16 %v178
      %v263 = vpack.c.b16 %v262, %v261
      %vm264 = vcmask 97280
      %v266 = vsel %vm264, %v243, 0
      %v269 = vsel %vm264, %v244, 0
      %v272 = vsel %vm264, %v245, 0
      %v275 = vsel %vm264, %v246, 0
      %v278 = vsel %vm264, %v247, 0
      %v281 = vsel %vm264, %v248, 0
      %v284 = vsel %vm264, %v249, 0
      %v287 = vsel %vm264, %v250, 0
      %v290 = vsel %vm264, %v251, 0
      %v293 = vsel %vm264, %v252, 0
      %v296 = vsel %vm264, %v253, 0
      %v299 = vsel %vm264, %v254, 0
      %v302 = vsel %vm264, %v255, 0
      %v305 = vsel %vm264, %v256, 0
      %v308 = vsel %vm264, %v257, 0
      %v311 = vsel %vm264, %v258, 0
      %vm313 = vcmask 1045504
      %v315 = vsel %vm313, %v263, 0
      %317 = vmatprep.subr.bf16.mxu0 0
      %318 = vmatpush1.bf16.msra.mxu0 %v315
      %319 = vmatprep.subr.bf16.mxu0 0
      %320 = vmatpush1.bf16.msra.mxu0 0
      %321 = vmatprep.subr.bf16.mxu0 0
      %322 = vmatpush1.bf16.msra.mxu0 0
      %323 = vmatprep.subr.bf16.mxu0 0
      %324 = vmatpush1.bf16.msra.mxu0 0
      %325 = vmatprep.subr.bf16.mxu0 0
      %326 = vmatpush1.bf16.msra.mxu0 0
      %327 = vmatprep.subr.bf16.mxu0 0
      %328 = vmatpush1.bf16.msra.mxu0 0
      %329 = vmatprep.subr.bf16.mxu0 0
      %330 = vmatpush1.bf16.msra.mxu0 0
      %331 = vmatprep.subr.bf16.mxu0 0
      %332 = vmatpush1.bf16.msra.mxu0 0
      %333 = vmatprep.subr.bf16.mxu0 0
      %334 = vmatpush1.bf16.msra.mxu0 0
      %335 = vmatprep.subr.bf16.mxu0 0
      %336 = vmatpush1.bf16.msra.mxu0 0
      %337 = vmatprep.subr.bf16.mxu0 0
      %338 = vmatpush1.bf16.msra.mxu0 0
      %339 = vmatprep.subr.bf16.mxu0 0
      %340 = vmatpush1.bf16.msra.mxu0 0
      %341 = vmatprep.subr.bf16.mxu0 0
      %342 = vmatpush1.bf16.msra.mxu0 0
      %343 = vmatprep.subr.bf16.mxu0 0
      %344 = vmatpush1.bf16.msra.mxu0 0
      %345 = vmatprep.subr.bf16.mxu0 0
      %346 = vmatpush1.bf16.msra.mxu0 0
      %347 = vmatprep.subr.bf16.mxu0 0
      %348 = vmatpush1.bf16.msra.mxu0 0
      %349 = vmatprep.mubr.bf16.mxu0 0
      %350 = vmatmul.mubr.bf16.gmra.mrb[0].mxu0 %v266
      %v351 = vpop.f32.mrb[0].mxu0
      %v352 = vadd.f32 0.0, %v351
      %v353 = vpop.f32.mrb[0].mxu0
      %v354 = vpop.f32.mrb[0].mxu0
      %v355 = vadd.f32 0.0, %v354
      %v356 = vpop.f32.mrb[0].mxu0
      %357 = vmatprep.mubr.bf16.mxu0 0
      %358 = vmatmul.mubr.bf16.gmra.mrb[0].mxu0 %v269
      %v359 = vpop.f32.mrb[0].mxu0
      %v360 = vadd.f32 0.0, %v359
      %v361 = vpop.f32.mrb[0].mxu0
      %v362 = vpop.f32.mrb[0].mxu0
      %v363 = vadd.f32 0.0, %v362
      %v364 = vpop.f32.mrb[0].mxu0
      %365 = vmatprep.mubr.bf16.mxu0 0
      %366 = vmatmul.mubr.bf16.gmra.mrb[0].mxu0 %v272
      %v367 = vpop.f32.mrb[0].mxu0
      %v368 = vadd.f32 0.0, %v367
      %v369 = vpop.f32.mrb[0].mxu0
      %v370 = vpop.f32.mrb[0].mxu0
      %v371 = vadd.f32 0.0, %v370
      %v372 = vpop.f32.mrb[0].mxu0
      %373 = vmatprep.mubr.bf16.mxu0 0
      %374 = vmatmul.mubr.bf16.gmra.mrb[0].mxu0 %v275
      %v375 = vpop.f32.mrb[0].mxu0
      %v376 = vadd.f32 0.0, %v375
      %v377 = vpop.f32.mrb[0].mxu0
      %v378 = vpop.f32.mrb[0].mxu0
      %v379 = vadd.f32 0.0, %v378
      %v380 = vpop.f32.mrb[0].mxu0
      %381 = vmatprep.mubr.bf16.mxu0 0
      %382 = vmatmul.mubr.bf16.gmra.mrb[0].mxu0 %v278
      %v383 = vpop.f32.mrb[0].mxu0
      %v384 = vadd.f32 0.0, %v383
      %v385 = vpop.f32.mrb[0].mxu0
      %v386 = vpop.f32.mrb[0].mxu0
      %v387 = vadd.f32 0.0, %v386
      %v388 = vpop.f32.mrb[0].mxu0
      %389 = vmatprep.mubr.bf16.mxu0 0
      %390 = vmatmul.mubr.bf16.gmra.mrb[0].mxu0 %v281
      %v391 = vpop.f32.mrb[0].mxu0
      %v392 = vadd.f32 0.0, %v391
      %v393 = vpop.f32.mrb[0].mxu0
      %v394 = vpop.f32.mrb[0].mxu0
      %v395 = vadd.f32 0.0, %v394
      %v396 = vpop.f32.mrb[0].mxu0
      %397 = vmatprep.mubr.bf16.mxu0 0
      %398 = vmatmul.mubr.bf16.gmra.mrb[0].mxu0 %v284
      %v399 = vpop.f32.mrb[0].mxu0
      %v400 = vadd.f32 0.0, %v399
      %v401 = vpop.f32.mrb[0].mxu0
      %v402 = vpop.f32.mrb[0].mxu0
      %v403 = vadd.f32 0.0, %v402
      %v404 = vpop.f32.mrb[0].mxu0
      %405 = vmatprep.mubr.bf16.mxu0 0
      %406 = vmatmul.mubr.bf16.gmra.mrb[0].mxu0 %v287
      %v407 = vpop.f32.mrb[0].mxu0
      %v408 = vadd.f32 0.0, %v407
      %v409 = vpop.f32.mrb[0].mxu0
      %v410 = vpop.f32.mrb[0].mxu0
      %v411 = vadd.f32 0.0, %v410
      %v412 = vpop.f32.mrb[0].mxu0
      %413 = vmatprep.mubr.bf16.mxu0 0
      %414 = vmatmul.mubr.bf16.gmra.mrb[0].mxu0 %v290
      %v415 = vpop.f32.mrb[0].mxu0
      %v416 = vadd.f32 0.0, %v415
      %v417 = vpop.f32.mrb[0].mxu0
      %v418 = vpop.f32.mrb[0].mxu0
      %v419 = vadd.f32 0.0, %v418
      %v420 = vpop.f32.mrb[0].mxu0
      %421 = vmatprep.mubr.bf16.mxu0 0
      %422 = vmatmul.mubr.bf16.gmra.mrb[0].mxu0 %v293
      %v423 = vpop.f32.mrb[0].mxu0
      %v424 = vadd.f32 0.0, %v423
      %v425 = vpop.f32.mrb[0].mxu0
      %v426 = vpop.f32.mrb[0].mxu0
      %v427 = vadd.f32 0.0, %v426
      %v428 = vpop.f32.mrb[0].mxu0
      %429 = vmatprep.mubr.bf16.mxu0 0
      %430 = vmatmul.mubr.bf16.gmra.mrb[0].mxu0 %v296
      %v431 = vpop.f32.mrb[0].mxu0
      %v432 = vadd.f32 0.0, %v431
      %v433 = vpop.f32.mrb[0].mxu0
      %v434 = vpop.f32.mrb[0].mxu0
      %v435 = vadd.f32 0.0, %v434
      %v436 = vpop.f32.mrb[0].mxu0
      %437 = vmatprep.mubr.bf16.mxu0 0
      %438 = vmatmul.mubr.bf16.gmra.mrb[0].mxu0 %v299
      %v439 = vpop.f32.mrb[0].mxu0
      %v440 = vadd.f32 0.0, %v439
      %v441 = vpop.f32.mrb[0].mxu0
      %v442 = vpop.f32.mrb[0].mxu0
      %v443 = vadd.f32 0.0, %v442
      %v444 = vpop.f32.mrb[0].mxu0
      %445 = vmatprep.mubr.bf16.mxu0 0
      %446 = vmatmul.mubr.bf16.gmra.mrb[0].mxu0 %v302
      %v447 = vpop.f32.mrb[0].mxu0
      %v448 = vadd.f32 0.0, %v447
      %v449 = vpop.f32.mrb[0].mxu0
      %v450 = vpop.f32.mrb[0].mxu0
      %v451 = vadd.f32 0.0, %v450
      %v452 = vpop.f32.mrb[0].mxu0
      %453 = vmatprep.mubr.bf16.mxu0 0
      %454 = vmatmul.mubr.bf16.gmra.mrb[0].mxu0 %v305
      %v455 = vpop.f32.mrb[0].mxu0
      %v456 = vadd.f32 0.0, %v455
      %v457 = vpop.f32.mrb[0].mxu0
      %v458 = vpop.f32.mrb[0].mxu0
      %v459 = vadd.f32 0.0, %v458
      %v460 = vpop.f32.mrb[0].mxu0
      %461 = vmatprep.mubr.bf16.mxu0 0
      %462 = vmatmul.mubr.bf16.gmra.mrb[0].mxu0 %v308
      %v463 = vpop.f32.mrb[0].mxu0
      %v464 = vadd.f32 0.0, %v463
      %v465 = vpop.f32.mrb[0].mxu0
      %v466 = vpop.f32.mrb[0].mxu0
      %v467 = vadd.f32 0.0, %v466
      %v468 = vpop.f32.mrb[0].mxu0
      %469 = vmatprep.mubr.bf16.mxu0 0
      %470 = vmatmul.mubr.bf16.gmra.mrb[0].mxu0 %v311
      %v471 = vpop.f32.mrb[0].mxu0
      %v472 = vadd.f32 0.0, %v471
      %v473 = vpop.f32.mrb[0].mxu0
      %v474 = vpop.f32.mrb[0].mxu0
      %v475 = vadd.f32 0.0, %v474
      %v476 = vpop.f32.mrb[0].mxu0
      %477 = vdwg.mxu0
      %vm478 = vcmask 64512
      %479 = vst.msk [vmem:[#allocation2] sm:$0xff] %vm478, %v352
      %480 = vst.msk [vmem:[#allocation2 + $0x8] sm:$0xff] %vm478, %v355
      %481 = vst.msk [vmem:[#allocation2 + $0x10] sm:$0xff] %vm478, %v360
      %482 = vst.msk [vmem:[#allocation2 + $0x18] sm:$0xff] %vm478, %v363
      %483 = vst.msk [vmem:[#allocation2 + $0x20] sm:$0xff] %vm478, %v368
      %484 = vst.msk [vmem:[#allocation2 + $0x28] sm:$0xff] %vm478, %v371
      %485 = vst.msk [vmem:[#allocation2 + $0x30] sm:$0xff] %vm478, %v376
      %486 = vst.msk [vmem:[#allocation2 + $0x38] sm:$0xff] %vm478, %v379
      %487 = vst.msk [vmem:[#allocation2 + $0x40] sm:$0xff] %vm478, %v384
      %488 = vst.msk [vmem:[#allocation2 + $0x48] sm:$0xff] %vm478, %v387
      %489 = vst.msk [vmem:[#allocation2 + $0x50] sm:$0xff] %vm478, %v392
      %490 = vst.msk [vmem:[#allocation2 + $0x58] sm:$0xff] %vm478, %v395
      %491 = vst.msk [vmem:[#allocation2 + $0x60] sm:$0xff] %vm478, %v400
      %492 = vst.msk [vmem:[#allocation2 + $0x68] sm:$0xff] %vm478, %v403
      %493 = vst.msk [vmem:[#allocation2 + $0x70] sm:$0xff] %vm478, %v408
      %494 = vst.msk [vmem:[#allocation2 + $0x78] sm:$0xff] %vm478, %v411
      %495 = vst.msk [vmem:[#allocation2 + $0x80] sm:$0xff] %vm478, %v416
      %496 = vst.msk [vmem:[#allocation2 + $0x88] sm:$0xff] %vm478, %v419
      %497 = vst.msk [vmem:[#allocation2 + $0x90] sm:$0xff] %vm478, %v424
      %498 = vst.msk [vmem:[#allocation2 + $0x98] sm:$0xff] %vm478, %v427
      %499 = vst.msk [vmem:[#allocation2 + $0xa0] sm:$0xff] %vm478, %v432
      %500 = vst.msk [vmem:[#allocation2 + $0xa8] sm:$0xff] %vm478, %v435
      %501 = vst.msk [vmem:[#allocation2 + $0xb0] sm:$0xff] %vm478, %v440
      %502 = vst.msk [vmem:[#allocation2 + $0xb8] sm:$0xff] %vm478, %v443
      %503 = vst.msk [vmem:[#allocation2 + $0xc0] sm:$0xff] %vm478, %v448
      %504 = vst.msk [vmem:[#allocation2 + $0xc8] sm:$0xff] %vm478, %v451
      %505 = vst.msk [vmem:[#allocation2 + $0xd0] sm:$0xff] %vm478, %v456
      %506 = vst.msk [vmem:[#allocation2 + $0xd8] sm:$0xff] %vm478, %v459
      %507 = vst.msk [vmem:[#allocation2 + $0xe0] sm:$0xff] %vm478, %v464
      %508 = vst.msk [vmem:[#allocation2 + $0xe8] sm:$0xff] %vm478, %v467
      %509 = vst.msk [vmem:[#allocation2 + $0xf0] sm:$0xff] %vm478, %v472
      %510 = vst.msk [vmem:[#allocation2 + $0xf8] sm:$0xff] %vm478, %v475
      %v511 = vld [vmem:[%s138 + $0x8] sm:$0xf]
      %v512 = vld [vmem:[%s138 + $0xc] sm:$0xf]
      %v513 = vld [vmem:[%s138 + $0x10] sm:$0xf]
      %v514 = vld [vmem:[%s138 + $0x14] sm:$0xf]
      %v515 = vld [vmem:[%s138 + $0x18] sm:$0xf]
      %v516 = vld [vmem:[%s138 + $0x1c] sm:$0xf]
      %v517 = vld [vmem:[%s138 + $0x20] sm:$0xf]
      %v518 = vld [vmem:[%s138 + $0x24] sm:$0xf]
      %v519 = vld [vmem:[%s138 + $0x28] sm:$0xf]
      %v520 = vld [vmem:[%s138 + $0x2c] sm:$0xf]
      %v521 = vld [vmem:[%s138 + $0x30] sm:$0xf]
      %v522 = vld [vmem:[%s138 + $0x34] sm:$0xf]
      %v523 = vld [vmem:[%s138 + $0x38] sm:$0xf]
      %v524 = vld [vmem:[%s138 + $0x3c] sm:$0xf]
      %v525 = vld [vmem:[%s138 + $0x40] sm:$0xf]
      %v526 = vld [vmem:[%s138 + $0x44] sm:$0xf]
      %v527 = vld [vmem:[%s138 + $0x48] sm:$0xf]
      %v528 = vld [vmem:[%s138 + $0x4c] sm:$0xf]
      %v529 = vld [vmem:[%s138 + $0x50] sm:$0xf]
      %v530 = vld [vmem:[%s138 + $0x54] sm:$0xf]
      %v531 = vld [vmem:[%s138 + $0x58] sm:$0xf]
      %v532 = vld [vmem:[%s138 + $0x5c] sm:$0xf]
      %v533 = vld [vmem:[%s138 + $0x60] sm:$0xf]
      %v534 = vld [vmem:[%s138 + $0x64] sm:$0xf]
      %v535 = vld [vmem:[%s138 + $0x68] sm:$0xf]
      %v536 = vld [vmem:[%s138 + $0x6c] sm:$0xf]
      %v537 = vld [vmem:[%s138 + $0x70] sm:$0xf]
      %v538 = vld [vmem:[%s138 + $0x74] sm:$0xf]
      %v539 = vld [vmem:[%s138 + $0x78] sm:$0xf]
      %v540 = vld [vmem:[%s138 + $0x7c] sm:$0xf]
      %v541 = vld [vmem:[%s138 + $0x80] sm:$0xf]
      %v542 = vld [vmem:[%s138 + $0x84] sm:$0xf]
      %s543 = scalar_lea.vmem %s1, 8
      %v544 = vld [vmem:[%s543] sm:$0xf]
      %v545 = vld [vmem:[%s543 + $0x4] sm:$0x3]
      %v578 = vunpack.c.l.b16 %v511
      %v579 = vunpack.c.l.b16 %v512
      %v580 = vunpack.c.l.b16 %v513
      %v581 = vunpack.c.l.b16 %v514
      %v582 = vunpack.c.l.b16 %v515
      %v583 = vunpack.c.l.b16 %v516
      %v584 = vunpack.c.l.b16 %v517
      %v585 = vunpack.c.l.b16 %v518
      %v586 = vunpack.c.l.b16 %v519
      %v587 = vunpack.c.l.b16 %v520
      %v588 = vunpack.c.l.b16 %v521
      %v589 = vunpack.c.l.b16 %v522
      %v590 = vunpack.c.l.b16 %v523
      %v591 = vunpack.c.l.b16 %v524
      %v592 = vunpack.c.l.b16 %v525
      %v593 = vunpack.c.l.b16 %v526
      %v594 = vunpack.c.l.b16 %v527
      %v595 = vunpack.c.l.b16 %v528
      %v596 = vunpack.c.l.b16 %v529
      %v597 = vunpack.c.l.b16 %v530
      %v598 = vunpack.c.l.b16 %v531
      %v599 = vunpack.c.l.b16 %v532
      %v600 = vunpack.c.l.b16 %v533
      %v601 = vunpack.c.l.b16 %v534
      %v602 = vunpack.c.l.b16 %v535
      %v603 = vunpack.c.l.b16 %v536
      %v604 = vunpack.c.l.b16 %v537
      %v605 = vunpack.c.l.b16 %v538
      %v606 = vunpack.c.l.b16 %v539
      %v607 = vunpack.c.l.b16 %v540
      %v608 = vunpack.c.l.b16 %v541
      %v609 = vunpack.c.l.b16 %v542
      %v610 = vpack.c.b16 %v579, %v578
      %v611 = vpack.c.b16 %v581, %v580
      %v612 = vpack.c.b16 %v583, %v582
      %v613 = vpack.c.b16 %v585, %v584
      %v614 = vpack.c.b16 %v587, %v586
      %v615 = vpack.c.b16 %v589, %v588
      %v616 = vpack.c.b16 %v591, %v590
      %v617 = vpack.c.b16 %v593, %v592
      %v618 = vpack.c.b16 %v595, %v594
      %v619 = vpack.c.b16 %v597, %v596
      %v620 = vpack.c.b16 %v599, %v598
      %v621 = vpack.c.b16 %v601, %v600
      %v622 = vpack.c.b16 %v603, %v602
      %v623 = vpack.c.b16 %v605, %v604
      %v624 = vpack.c.b16 %v607, %v606
      %v625 = vpack.c.b16 %v609, %v608
      %v628 = vunpack.c.l.b16 %v544
      %v629 = vunpack.c.l.b16 %v545
      %v630 = vpack.c.b16 %v629, %v628
      %v632 = vsel %vm264, %v610, 0
      %v635 = vsel %vm264, %v611, 0
      %v638 = vsel %vm264, %v612, 0
      %v641 = vsel %vm264, %v613, 0
      %v644 = vsel %vm264, %v614, 0
      %v647 = vsel %vm264, %v615, 0
      %v650 = vsel %vm264, %v616, 0
      %v653 = vsel %vm264, %v617, 0
      %v656 = vsel %vm264, %v618, 0
      %v659 = vsel %vm264, %v619, 0
      %v662 = vsel %vm264, %v620, 0
      %v665 = vsel %vm264, %v621, 0
      %v668 = vsel %vm264, %v622, 0
      %v671 = vsel %vm264, %v623, 0
      %v674 = vsel %vm264, %v624, 0
      %v677 = vsel %vm264, %v625, 0
      %v680 = vsel %vm313, %v630, 0
      %682 = vmatprep.subr.bf16.mxu0 0
      %683 = vmatpush1.bf16.msra.mxu0 %v680
      %684 = vmatprep.subr.bf16.mxu0 0
      %685 = vmatpush1.bf16.msra.mxu0 0
      %686 = vmatprep.subr.bf16.mxu0 0
      %687 = vmatpush1.bf16.msra.mxu0 0
      %688 = vmatprep.subr.bf16.mxu0 0
      %689 = vmatpush1.bf16.msra.mxu0 0
      %690 = vmatprep.subr.bf16.mxu0 0
      %691 = vmatpush1.bf16.msra.mxu0 0
      %692 = vmatprep.subr.bf16.mxu0 0
      %693 = vmatpush1.bf16.msra.mxu0 0
      %694 = vmatprep.subr.bf16.mxu0 0
      %695 = vmatpush1.bf16.msra.mxu0 0
      %696 = vmatprep.subr.bf16.mxu0 0
      %697 = vmatpush1.bf16.msra.mxu0 0
      %698 = vmatprep.subr.bf16.mxu0 0
      %699 = vmatpush1.bf16.msra.mxu0 0
      %700 = vmatprep.subr.bf16.mxu0 0
      %701 = vmatpush1.bf16.msra.mxu0 0
      %702 = vmatprep.subr.bf16.mxu0 0
      %703 = vmatpush1.bf16.msra.mxu0 0
      %704 = vmatprep.subr.bf16.mxu0 0
      %705 = vmatpush1.bf16.msra.mxu0 0
      %706 = vmatprep.subr.bf16.mxu0 0
      %707 = vmatpush1.bf16.msra.mxu0 0
      %708 = vmatprep.subr.bf16.mxu0 0
      %709 = vmatpush1.bf16.msra.mxu0 0
      %710 = vmatprep.subr.bf16.mxu0 0
      %711 = vmatpush1.bf16.msra.mxu0 0
      %712 = vmatprep.subr.bf16.mxu0 0
      %713 = vmatpush1.bf16.msra.mxu0 0
      %714 = vmatprep.mubr.bf16.mxu0 0
      %715 = vmatmul.mubr.bf16.gmra.mrb[0].mxu0 %v632
      %v716 = vpop.f32.mrb[0].mxu0
      %v717 = vadd.f32 0.0, %v716
      %v718 = vpop.f32.mrb[0].mxu0
      %v719 = vpop.f32.mrb[0].mxu0
      %v720 = vadd.f32 0.0, %v719
      %v721 = vpop.f32.mrb[0].mxu0
      %722 = vmatprep.mubr.bf16.mxu0 0
      %723 = vmatmul.mubr.bf16.gmra.mrb[0].mxu0 %v635
      %v724 = vpop.f32.mrb[0].mxu0
      %v725 = vadd.f32 0.0, %v724
      %v726 = vpop.f32.mrb[0].mxu0
      %v727 = vpop.f32.mrb[0].mxu0
      %v728 = vadd.f32 0.0, %v727
      %v729 = vpop.f32.mrb[0].mxu0
      %730 = vmatprep.mubr.bf16.mxu0 0
      %731 = vmatmul.mubr.bf16.gmra.mrb[0].mxu0 %v638
      %v732 = vpop.f32.mrb[0].mxu0
      %v733 = vadd.f32 0.0, %v732
      %v734 = vpop.f32.mrb[0].mxu0
      %v735 = vpop.f32.mrb[0].mxu0
      %v736 = vadd.f32 0.0, %v735
      %v737 = vpop.f32.mrb[0].mxu0
      %738 = vmatprep.mubr.bf16.mxu0 0
      %739 = vmatmul.mubr.bf16.gmra.mrb[0].mxu0 %v641
      %v740 = vpop.f32.mrb[0].mxu0
      %v741 = vadd.f32 0.0, %v740
      %v742 = vpop.f32.mrb[0].mxu0
      %v743 = vpop.f32.mrb[0].mxu0
      %v744 = vadd.f32 0.0, %v743
      %v745 = vpop.f32.mrb[0].mxu0
      %746 = vmatprep.mubr.bf16.mxu0 0
      %747 = vmatmul.mubr.bf16.gmra.mrb[0].mxu0 %v644
      %v748 = vpop.f32.mrb[0].mxu0
      %v749 = vadd.f32 0.0, %v748
      %v750 = vpop.f32.mrb[0].mxu0
      %v751 = vpop.f32.mrb[0].mxu0
      %v752 = vadd.f32 0.0, %v751
      %v753 = vpop.f32.mrb[0].mxu0
      %754 = vmatprep.mubr.bf16.mxu0 0
      %755 = vmatmul.mubr.bf16.gmra.mrb[0].mxu0 %v647
      %v756 = vpop.f32.mrb[0].mxu0
      %v757 = vadd.f32 0.0, %v756
      %v758 = vpop.f32.mrb[0].mxu0
      %v759 = vpop.f32.mrb[0].mxu0
      %v760 = vadd.f32 0.0, %v759
      %v761 = vpop.f32.mrb[0].mxu0
      %762 = vmatprep.mubr.bf16.mxu0 0
      %763 = vmatmul.mubr.bf16.gmra.mrb[0].mxu0 %v650
      %v764 = vpop.f32.mrb[0].mxu0
      %v765 = vadd.f32 0.0, %v764
      %v766 = vpop.f32.mrb[0].mxu0
      %v767 = vpop.f32.mrb[0].mxu0
      %v768 = vadd.f32 0.0, %v767
      %v769 = vpop.f32.mrb[0].mxu0
      %770 = vmatprep.mubr.bf16.mxu0 0
      %771 = vmatmul.mubr.bf16.gmra.mrb[0].mxu0 %v653
      %v772 = vpop.f32.mrb[0].mxu0
      %v773 = vadd.f32 0.0, %v772
      %v774 = vpop.f32.mrb[0].mxu0
      %v775 = vpop.f32.mrb[0].mxu0
      %v776 = vadd.f32 0.0, %v775
      %v777 = vpop.f32.mrb[0].mxu0
      %778 = vmatprep.mubr.bf16.mxu0 0
      %779 = vmatmul.mubr.bf16.gmra.mrb[0].mxu0 %v656
      %v780 = vpop.f32.mrb[0].mxu0
      %v781 = vadd.f32 0.0, %v780
      %v782 = vpop.f32.mrb[0].mxu0
      %v783 = vpop.f32.mrb[0].mxu0
      %v784 = vadd.f32 0.0, %v783
      %v785 = vpop.f32.mrb[0].mxu0
      %786 = vmatprep.mubr.bf16.mxu0 0
      %787 = vmatmul.mubr.bf16.gmra.mrb[0].mxu0 %v659
      %v788 = vpop.f32.mrb[0].mxu0
      %v789 = vadd.f32 0.0, %v788
      %v790 = vpop.f32.mrb[0].mxu0
      %v791 = vpop.f32.mrb[0].mxu0
      %v792 = vadd.f32 0.0, %v791
      %v793 = vpop.f32.mrb[0].mxu0
      %794 = vmatprep.mubr.bf16.mxu0 0
      %795 = vmatmul.mubr.bf16.gmra.mrb[0].mxu0 %v662
      %v796 = vpop.f32.mrb[0].mxu0
      %v797 = vadd.f32 0.0, %v796
      %v798 = vpop.f32.mrb[0].mxu0
      %v799 = vpop.f32.mrb[0].mxu0
      %v800 = vadd.f32 0.0, %v799
      %v801 = vpop.f32.mrb[0].mxu0
      %802 = vmatprep.mubr.bf16.mxu0 0
      %803 = vmatmul.mubr.bf16.gmra.mrb[0].mxu0 %v665
      %v804 = vpop.f32.mrb[0].mxu0
      %v805 = vadd.f32 0.0, %v804
      %v806 = vpop.f32.mrb[0].mxu0
      %v807 = vpop.f32.mrb[0].mxu0
      %v808 = vadd.f32 0.0, %v807
      %v809 = vpop.f32.mrb[0].mxu0
      %810 = vmatprep.mubr.bf16.mxu0 0
      %811 = vmatmul.mubr.bf16.gmra.mrb[0].mxu0 %v668
      %v812 = vpop.f32.mrb[0].mxu0
      %v813 = vadd.f32 0.0, %v812
      %v814 = vpop.f32.mrb[0].mxu0
      %v815 = vpop.f32.mrb[0].mxu0
      %v816 = vadd.f32 0.0, %v815
      %v817 = vpop.f32.mrb[0].mxu0
      %818 = vmatprep.mubr.bf16.mxu0 0
      %819 = vmatmul.mubr.bf16.gmra.mrb[0].mxu0 %v671
      %v820 = vpop.f32.mrb[0].mxu0
      %v821 = vadd.f32 0.0, %v820
      %v822 = vpop.f32.mrb[0].mxu0
      %v823 = vpop.f32.mrb[0].mxu0
      %v824 = vadd.f32 0.0, %v823
      %v825 = vpop.f32.mrb[0].mxu0
      %826 = vmatprep.mubr.bf16.mxu0 0
      %827 = vmatmul.mubr.bf16.gmra.mrb[0].mxu0 %v674
      %v828 = vpop.f32.mrb[0].mxu0
      %v829 = vadd.f32 0.0, %v828
      %v830 = vpop.f32.mrb[0].mxu0
      %v831 = vpop.f32.mrb[0].mxu0
      %v832 = vadd.f32 0.0, %v831
      %v833 = vpop.f32.mrb[0].mxu0
      %834 = vmatprep.mubr.bf16.mxu0 0
      %835 = vmatmul.mubr.bf16.gmra.mrb[0].mxu0 %v677
      %v836 = vpop.f32.mrb[0].mxu0
      %v837 = vadd.f32 0.0, %v836
      %v838 = vpop.f32.mrb[0].mxu0
      %v839 = vpop.f32.mrb[0].mxu0
      %v840 = vadd.f32 0.0, %v839
      %v841 = vpop.f32.mrb[0].mxu0
      %842 = vdwg.mxu0
      %v843 = vld [vmem:[#allocation2] sm:$0xff]
      %v844 = vld [vmem:[#allocation2 + $0x8] sm:$0xff]
      %v845 = vld [vmem:[#allocation2 + $0x10] sm:$0xff]
      %v846 = vld [vmem:[#allocation2 + $0x18] sm:$0xff]
      %v847 = vld [vmem:[#allocation2 + $0x20] sm:$0xff]
      %v848 = vld [vmem:[#allocation2 + $0x28] sm:$0xff]
      %v849 = vld [vmem:[#allocation2 + $0x30] sm:$0xff]
      %v850 = vld [vmem:[#allocation2 + $0x38] sm:$0xff]
      %v851 = vld [vmem:[#allocation2 + $0x40] sm:$0xff]
      %v852 = vld [vmem:[#allocation2 + $0x48] sm:$0xff]
      %v853 = vld [vmem:[#allocation2 + $0x50] sm:$0xff]
      %v854 = vld [vmem:[#allocation2 + $0x58] sm:$0xff]
      %v855 = vld [vmem:[#allocation2 + $0x60] sm:$0xff]
      %v856 = vld [vmem:[#allocation2 + $0x68] sm:$0xff]
      %v857 = vld [vmem:[#allocation2 + $0x70] sm:$0xff]
      %v858 = vld [vmem:[#allocation2 + $0x78] sm:$0xff]
      %v859 = vld [vmem:[#allocation2 + $0x80] sm:$0xff]
      %v860 = vld [vmem:[#allocation2 + $0x88] sm:$0xff]
      %v861 = vld [vmem:[#allocation2 + $0x90] sm:$0xff]
      %v862 = vld [vmem:[#allocation2 + $0x98] sm:$0xff]
      %v863 = vld [vmem:[#allocation2 + $0xa0] sm:$0xff]
      %v864 = vld [vmem:[#allocation2 + $0xa8] sm:$0xff]
      %v865 = vld [vmem:[#allocation2 + $0xb0] sm:$0xff]
      %v866 = vld [vmem:[#allocation2 + $0xb8] sm:$0xff]
      %v867 = vld [vmem:[#allocation2 + $0xc0] sm:$0xff]
      %v868 = vld [vmem:[#allocation2 + $0xc8] sm:$0xff]
      %v869 = vld [vmem:[#allocation2 + $0xd0] sm:$0xff]
      %v870 = vld [vmem:[#allocation2 + $0xd8] sm:$0xff]
      %v871 = vld [vmem:[#allocation2 + $0xe0] sm:$0xff]
      %v872 = vld [vmem:[#allocation2 + $0xe8] sm:$0xff]
      %v873 = vld [vmem:[#allocation2 + $0xf0] sm:$0xff]
      %v874 = vld [vmem:[#allocation2 + $0xf8] sm:$0xff]
      %v875 = vadd.f32 %v843, %v717
      %v876 = vadd.f32 %v844, %v720
      %v877 = vadd.f32 %v845, %v725
      %v878 = vadd.f32 %v846, %v728
      %v879 = vadd.f32 %v847, %v733
      %v880 = vadd.f32 %v848, %v736
      %v881 = vadd.f32 %v849, %v741
      %v882 = vadd.f32 %v850, %v744
      %v883 = vadd.f32 %v851, %v749
      %v884 = vadd.f32 %v852, %v752
      %v885 = vadd.f32 %v853, %v757
      %v886 = vadd.f32 %v854, %v760
      %v887 = vadd.f32 %v855, %v765
      %v888 = vadd.f32 %v856, %v768
      %v889 = vadd.f32 %v857, %v773
      %v890 = vadd.f32 %v858, %v776
      %v891 = vadd.f32 %v859, %v781
      %v892 = vadd.f32 %v860, %v784
      %v893 = vadd.f32 %v861, %v789
      %v894 = vadd.f32 %v862, %v792
      %v895 = vadd.f32 %v863, %v797
      %v896 = vadd.f32 %v864, %v800
      %v897 = vadd.f32 %v865, %v805
      %v898 = vadd.f32 %v866, %v808
      %v899 = vadd.f32 %v867, %v813
      %v900 = vadd.f32 %v868, %v816
      %v901 = vadd.f32 %v869, %v821
      %v902 = vadd.f32 %v870, %v824
      %v903 = vadd.f32 %v871, %v829
      %v904 = vadd.f32 %v872, %v832
      %v905 = vadd.f32 %v873, %v837
      %v906 = vadd.f32 %v874, %v840
      %907 = vst.msk [vmem:[#allocation2] sm:$0xff] %vm478, %v875
      %908 = vst.msk [vmem:[#allocation2 + $0x8] sm:$0xff] %vm478, %v876
      %909 = vst.msk [vmem:[#allocation2 + $0x10] sm:$0xff] %vm478, %v877
      %910 = vst.msk [vmem:[#allocation2 + $0x18] sm:$0xff] %vm478, %v878
      %911 = vst.msk [vmem:[#allocation2 + $0x20] sm:$0xff] %vm478, %v879
      %912 = vst.msk [vmem:[#allocation2 + $0x28] sm:$0xff] %vm478, %v880
      %913 = vst.msk [vmem:[#allocation2 + $0x30] sm:$0xff] %vm478, %v881
      %914 = vst.msk [vmem:[#allocation2 + $0x38] sm:$0xff] %vm478, %v882
      %915 = vst.msk [vmem:[#allocation2 + $0x40] sm:$0xff] %vm478, %v883
      %916 = vst.msk [vmem:[#allocation2 + $0x48] sm:$0xff] %vm478, %v884
      %917 = vst.msk [vmem:[#allocation2 + $0x50] sm:$0xff] %vm478, %v885
      %918 = vst.msk [vmem:[#allocation2 + $0x58] sm:$0xff] %vm478, %v886
      %919 = vst.msk [vmem:[#allocation2 + $0x60] sm:$0xff] %vm478, %v887
      %920 = vst.msk [vmem:[#allocation2 + $0x68] sm:$0xff] %vm478, %v888
      %921 = vst.msk [vmem:[#allocation2 + $0x70] sm:$0xff] %vm478, %v889
      %922 = vst.msk [vmem:[#allocation2 + $0x78] sm:$0xff] %vm478, %v890
      %923 = vst.msk [vmem:[#allocation2 + $0x80] sm:$0xff] %vm478, %v891
      %924 = vst.msk [vmem:[#allocation2 + $0x88] sm:$0xff] %vm478, %v892
      %925 = vst.msk [vmem:[#allocation2 + $0x90] sm:$0xff] %vm478, %v893
      %926 = vst.msk [vmem:[#allocation2 + $0x98] sm:$0xff] %vm478, %v894
      %927 = vst.msk [vmem:[#allocation2 + $0xa0] sm:$0xff] %vm478, %v895
      %928 = vst.msk [vmem:[#allocation2 + $0xa8] sm:$0xff] %vm478, %v896
      %929 = vst.msk [vmem:[#allocation2 + $0xb0] sm:$0xff] %vm478, %v897
      %930 = vst.msk [vmem:[#allocation2 + $0xb8] sm:$0xff] %vm478, %v898
      %931 = vst.msk [vmem:[#allocation2 + $0xc0] sm:$0xff] %vm478, %v899
      %932 = vst.msk [vmem:[#allocation2 + $0xc8] sm:$0xff] %vm478, %v900
      %933 = vst.msk [vmem:[#allocation2 + $0xd0] sm:$0xff] %vm478, %v901
      %934 = vst.msk [vmem:[#allocation2 + $0xd8] sm:$0xff] %vm478, %v902
      %935 = vst.msk [vmem:[#allocation2 + $0xe0] sm:$0xff] %vm478, %v903
      %936 = vst.msk [vmem:[#allocation2 + $0xe8] sm:$0xff] %vm478, %v904
      %937 = vst.msk [vmem:[#allocation2 + $0xf0] sm:$0xff] %vm478, %v905
      %938 = vst.msk [vmem:[#allocation2 + $0xf8] sm:$0xff] %vm478, %v906
      %v939 = vld [vmem:[%s138 + $0x10] sm:$0xf]
      %v940 = vld [vmem:[%s138 + $0x14] sm:$0xf]
      %v941 = vld [vmem:[%s138 + $0x18] sm:$0xf]
      %v942 = vld [vmem:[%s138 + $0x1c] sm:$0xf]
      %v943 = vld [vmem:[%s138 + $0x20] sm:$0xf]
      %v944 = vld [vmem:[%s138 + $0x24] sm:$0xf]
      %v945 = vld [vmem:[%s138 + $0x28] sm:$0xf]
      %v946 = vld [vmem:[%s138 + $0x2c] sm:$0xf]
      %v947 = vld [vmem:[%s138 + $0x30] sm:$0xf]
      %v948 = vld [vmem:[%s138 + $0x34] sm:$0xf]
      %v949 = vld [vmem:[%s138 + $0x38] sm:$0xf]
      %v950 = vld [vmem:[%s138 + $0x3c] sm:$0xf]
      %v951 = vld [vmem:[%s138 + $0x40] sm:$0xf]
      %v952 = vld [vmem:[%s138 + $0x44] sm:$0xf]
      %v953 = vld [vmem:[%s138 + $0x48] sm:$0xf]
      %v954 = vld [vmem:[%s138 + $0x4c] sm:$0xf]
      %v955 = vld [vmem:[%s138 + $0x50] sm:$0xf]
      %v956 = vld [vmem:[%s138 + $0x54] sm:$0xf]
      %v957 = vld [vmem:[%s138 + $0x58] sm:$0xf]
      %v958 = vld [vmem:[%s138 + $0x5c] sm:$0xf]
      %v959 = vld [vmem:[%s138 + $0x60] sm:$0xf]
      %v960 = vld [vmem:[%s138 + $0x64] sm:$0xf]
      %v961 = vld [vmem:[%s138 + $0x68] sm:$0xf]
      %v962 = vld [vmem:[%s138 + $0x6c] sm:$0xf]
      %v963 = vld [vmem:[%s138 + $0x70] sm:$0xf]
      %v964 = vld [vmem:[%s138 + $0x74] sm:$0xf]
      %v965 = vld [vmem:[%s138 + $0x78] sm:$0xf]
      %v966 = vld [vmem:[%s138 + $0x7c] sm:$0xf]
      %v967 = vld [vmem:[%s138 + $0x80] sm:$0xf]
      %v968 = vld [vmem:[%s138 + $0x84] sm:$0xf]
      %v969 = vld [vmem:[%s138 + $0x88] sm:$0xf]
      %v970 = vld [vmem:[%s138 + $0x8c] sm:$0xf]
      %s971 = scalar_lea.vmem %s1, 16
      %v972 = vld [vmem:[%s971] sm:$0xf]
      %v973 = vld [vmem:[%s971 + $0x4] sm:$0x3]
      %v1006 = vunpack.c.l.b16 %v939
      %v1007 = vunpack.c.l.b16 %v940
      %v1008 = vunpack.c.l.b16 %v941
      %v1009 = vunpack.c.l.b16 %v942
      %v1010 = vunpack.c.l.b16 %v943
      %v1011 = vunpack.c.l.b16 %v944
      %v1012 = vunpack.c.l.b16 %v945
      %v1013 = vunpack.c.l.b16 %v946
      %v1014 = vunpack.c.l.b16 %v947
      %v1015 = vunpack.c.l.b16 %v948
      %v1016 = vunpack.c.l.b16 %v949
      %v1017 = vunpack.c.l.b16 %v950
      %v1018 = vunpack.c.l.b16 %v951
      %v1019 = vunpack.c.l.b16 %v952
      %v1020 = vunpack.c.l.b16 %v953
      %v1021 = vunpack.c.l.b16 %v954
      %v1022 = vunpack.c.l.b16 %v955
      %v1023 = vunpack.c.l.b16 %v956
      %v1024 = vunpack.c.l.b16 %v957
      %v1025 = vunpack.c.l.b16 %v958
      %v1026 = vunpack.c.l.b16 %v959
      %v1027 = vunpack.c.l.b16 %v960
      %v1028 = vunpack.c.l.b16 %v961
      %v1029 = vunpack.c.l.b16 %v962
      %v1030 = vunpack.c.l.b16 %v963
      %v1031 = vunpack.c.l.b16 %v964
      %v1032 = vunpack.c.l.b16 %v965
      %v1033 = vunpack.c.l.b16 %v966
      %v1034 = vunpack.c.l.b16 %v967
      %v1035 = vunpack.c.l.b16 %v968
      %v1036 = vunpack.c.l.b16 %v969
      %v1037 = vunpack.c.l.b16 %v970
      %v1038 = vpack.c.b16 %v1007, %v1006
      %v1039 = vpack.c.b16 %v1009, %v1008
      %v1040 = vpack.c.b16 %v1011, %v1010
      %v1041 = vpack.c.b16 %v1013, %v1012
      %v1042 = vpack.c.b16 %v1015, %v1014
      %v1043 = vpack.c.b16 %v1017, %v1016
      %v1044 = vpack.c.b16 %v1019, %v1018
      %v1045 = vpack.c.b16 %v1021, %v1020
      %v1046 = vpack.c.b16 %v1023, %v1022
      %v1047 = vpack.c.b16 %v1025, %v1024
      %v1048 = vpack.c.b16 %v1027, %v1026
      %v1049 = vpack.c.b16 %v1029, %v1028
      %v1050 = vpack.c.b16 %v1031, %v1030
      %v1051 = vpack.c.b16 %v1033, %v1032
      %v1052 = vpack.c.b16 %v1035, %v1034
      %v1053 = vpack.c.b16 %v1037, %v1036
      %v1056 = vunpack.c.l.b16 %v972
      %v1057 = vunpack.c.l.b16 %v973
      %v1058 = vpack.c.b16 %v1057, %v1056
      %v1060 = vsel %vm264, %v1038, 0
      %v1063 = vsel %vm264, %v1039, 0
      %v1066 = vsel %vm264, %v1040, 0
      %v1069 = vsel %vm264, %v1041, 0
      %v1072 = vsel %vm264, %v1042, 0
      %v1075 = vsel %vm264, %v1043, 0
      %v1078 = vsel %vm264, %v1044, 0
      %v1081 = vsel %vm264, %v1045, 0
      %v1084 = vsel %vm264, %v1046, 0
      %v1087 = vsel %vm264, %v1047, 0
      %v1090 = vsel %vm264, %v1048, 0
      %v1093 = vsel %vm264, %v1049, 0
      %v1096 = vsel %vm264, %v1050, 0
      %v1099 = vsel %vm264, %v1051, 0
      %v1102 = vsel %vm264, %v1052, 0
      %v1105 = vsel %vm264, %v1053, 0
      %v1108 = vsel %vm313, %v1058, 0
      %1110 = vmatprep.subr.bf16.mxu0 0
      %1111 = vmatpush1.bf16.msra.mxu0 %v1108
      %1112 = vmatprep.subr.bf16.mxu0 0
      %1113 = vmatpush1.bf16.msra.mxu0 0
      %1114 = vmatprep.subr.bf16.mxu0 0
      %1115 = vmatpush1.bf16.msra.mxu0 0
      %1116 = vmatprep.subr.bf16.mxu0 0
      %1117 = vmatpush1.bf16.msra.mxu0 0
      %1118 = vmatprep.subr.bf16.mxu0 0
      %1119 = vmatpush1.bf16.msra.mxu0 0
      %1120 = vmatprep.subr.bf16.mxu0 0
      %1121 = vmatpush1.bf16.msra.mxu0 0
      %1122 = vmatprep.subr.bf16.mxu0 0
      %1123 = vmatpush1.bf16.msra.mxu0 0
      %1124 = vmatprep.subr.bf16.mxu0 0
      %1125 = vmatpush1.bf16.msra.mxu0 0
      %1126 = vmatprep.subr.bf16.mxu0 0
      %1127 = vmatpush1.bf16.msra.mxu0 0
      %1128 = vmatprep.subr.bf16.mxu0 0
      %1129 = vmatpush1.bf16.msra.mxu0 0
      %1130 = vmatprep.subr.bf16.mxu0 0
      %1131 = vmatpush1.bf16.msra.mxu0 0
      %1132 = vmatprep.subr.bf16.mxu0 0
      %1133 = vmatpush1.bf16.msra.mxu0 0
      %1134 = vmatprep.subr.bf16.mxu0 0
      %1135 = vmatpush1.bf16.msra.mxu0 0
      %1136 = vmatprep.subr.bf16.mxu0 0
      %1137 = vmatpush1.bf16.msra.mxu0 0
      %1138 = vmatprep.subr.bf16.mxu0 0
      %1139 = vmatpush1.bf16.msra.mxu0 0
      %1140 = vmatprep.subr.bf16.mxu0 0
      %1141 = vmatpush1.bf16.msra.mxu0 0
      %1142 = vmatprep.mubr.bf16.mxu0 0
      %1143 = vmatmul.mubr.bf16.gmra.mrb[0].mxu0 %v1060
      %v1144 = vpop.f32.mrb[0].mxu0
      %v1145 = vadd.f32 0.0, %v1144
      %v1146 = vpop.f32.mrb[0].mxu0
      %v1147 = vpop.f32.mrb[0].mxu0
      %v1148 = vadd.f32 0.0, %v1147
      %v1149 = vpop.f32.mrb[0].mxu0
      %1150 = vmatprep.mubr.bf16.mxu0 0
      %1151 = vmatmul.mubr.bf16.gmra.mrb[0].mxu0 %v1063
      %v1152 = vpop.f32.mrb[0].mxu0
      %v1153 = vadd.f32 0.0, %v1152
      %v1154 = vpop.f32.mrb[0].mxu0
      %v1155 = vpop.f32.mrb[0].mxu0
      %v1156 = vadd.f32 0.0, %v1155
      %v1157 = vpop.f32.mrb[0].mxu0
      %1158 = vmatprep.mubr.bf16.mxu0 0
      %1159 = vmatmul.mubr.bf16.gmra.mrb[0].mxu0 %v1066
      %v1160 = vpop.f32.mrb[0].mxu0
      %v1161 = vadd.f32 0.0, %v1160
      %v1162 = vpop.f32.mrb[0].mxu0
      %v1163 = vpop.f32.mrb[0].mxu0
      %v1164 = vadd.f32 0.0, %v1163
      %v1165 = vpop.f32.mrb[0].mxu0
      %1166 = vmatprep.mubr.bf16.mxu0 0
      %1167 = vmatmul.mubr.bf16.gmra.mrb[0].mxu0 %v1069
      %v1168 = vpop.f32.mrb[0].mxu0
      %v1169 = vadd.f32 0.0, %v1168
      %v1170 = vpop.f32.mrb[0].mxu0
      %v1171 = vpop.f32.mrb[0].mxu0
      %v1172 = vadd.f32 0.0, %v1171
      %v1173 = vpop.f32.mrb[0].mxu0
      %1174 = vmatprep.mubr.bf16.mxu0 0
      %1175 = vmatmul.mubr.bf16.gmra.mrb[0].mxu0 %v1072
      %v1176 = vpop.f32.mrb[0].mxu0
      %v1177 = vadd.f32 0.0, %v1176
      %v1178 = vpop.f32.mrb[0].mxu0
      %v1179 = vpop.f32.mrb[0].mxu0
      %v1180 = vadd.f32 0.0, %v1179
      %v1181 = vpop.f32.mrb[0].mxu0
      %1182 = vmatprep.mubr.bf16.mxu0 0
      %1183 = vmatmul.mubr.bf16.gmra.mrb[0].mxu0 %v1075
      %v1184 = vpop.f32.mrb[0].mxu0
      %v1185 = vadd.f32 0.0, %v1184
      %v1186 = vpop.f32.mrb[0].mxu0
      %v1187 = vpop.f32.mrb[0].mxu0
      %v1188 = vadd.f32 0.0, %v1187
      %v1189 = vpop.f32.mrb[0].mxu0
      %1190 = vmatprep.mubr.bf16.mxu0 0
      %1191 = vmatmul.mubr.bf16.gmra.mrb[0].mxu0 %v1078
      %v1192 = vpop.f32.mrb[0].mxu0
      %v1193 = vadd.f32 0.0, %v1192
      %v1194 = vpop.f32.mrb[0].mxu0
      %v1195 = vpop.f32.mrb[0].mxu0
      %v1196 = vadd.f32 0.0, %v1195
      %v1197 = vpop.f32.mrb[0].mxu0
      %1198 = vmatprep.mubr.bf16.mxu0 0
      %1199 = vmatmul.mubr.bf16.gmra.mrb[0].mxu0 %v1081
      %v1200 = vpop.f32.mrb[0].mxu0
      %v1201 = vadd.f32 0.0, %v1200
      %v1202 = vpop.f32.mrb[0].mxu0
      %v1203 = vpop.f32.mrb[0].mxu0
      %v1204 = vadd.f32 0.0, %v1203
      %v1205 = vpop.f32.mrb[0].mxu0
      %1206 = vmatprep.mubr.bf16.mxu0 0
      %1207 = vmatmul.mubr.bf16.gmra.mrb[0].mxu0 %v1084
      %v1208 = vpop.f32.mrb[0].mxu0
      %v1209 = vadd.f32 0.0, %v1208
      %v1210 = vpop.f32.mrb[0].mxu0
      %v1211 = vpop.f32.mrb[0].mxu0
      %v1212 = vadd.f32 0.0, %v1211
      %v1213 = vpop.f32.mrb[0].mxu0
      %1214 = vmatprep.mubr.bf16.mxu0 0
      %1215 = vmatmul.mubr.bf16.gmra.mrb[0].mxu0 %v1087
      %v1216 = vpop.f32.mrb[0].mxu0
      %v1217 = vadd.f32 0.0, %v1216
      %v1218 = vpop.f32.mrb[0].mxu0
      %v1219 = vpop.f32.mrb[0].mxu0
      %v1220 = vadd.f32 0.0, %v1219
      %v1221 = vpop.f32.mrb[0].mxu0
      %1222 = vmatprep.mubr.bf16.mxu0 0
      %1223 = vmatmul.mubr.bf16.gmra.mrb[0].mxu0 %v1090
      %v1224 = vpop.f32.mrb[0].mxu0
      %v1225 = vadd.f32 0.0, %v1224
      %v1226 = vpop.f32.mrb[0].mxu0
      %v1227 = vpop.f32.mrb[0].mxu0
      %v1228 = vadd.f32 0.0, %v1227
      %v1229 = vpop.f32.mrb[0].mxu0
      %1230 = vmatprep.mubr.bf16.mxu0 0
      %1231 = vmatmul.mubr.bf16.gmra.mrb[0].mxu0 %v1093
      %v1232 = vpop.f32.mrb[0].mxu0
      %v1233 = vadd.f32 0.0, %v1232
      %v1234 = vpop.f32.mrb[0].mxu0
      %v1235 = vpop.f32.mrb[0].mxu0
      %v1236 = vadd.f32 0.0, %v1235
      %v1237 = vpop.f32.mrb[0].mxu0
      %1238 = vmatprep.mubr.bf16.mxu0 0
      %1239 = vmatmul.mubr.bf16.gmra.mrb[0].mxu0 %v1096
      %v1240 = vpop.f32.mrb[0].mxu0
      %v1241 = vadd.f32 0.0, %v1240
      %v1242 = vpop.f32.mrb[0].mxu0
      %v1243 = vpop.f32.mrb[0].mxu0
      %v1244 = vadd.f32 0.0, %v1243
      %v1245 = vpop.f32.mrb[0].mxu0
      %1246 = vmatprep.mubr.bf16.mxu0 0
      %1247 = vmatmul.mubr.bf16.gmra.mrb[0].mxu0 %v1099
      %v1248 = vpop.f32.mrb[0].mxu0
      %v1249 = vadd.f32 0.0, %v1248
      %v1250 = vpop.f32.mrb[0].mxu0
      %v1251 = vpop.f32.mrb[0].mxu0
      %v1252 = vadd.f32 0.0, %v1251
      %v1253 = vpop.f32.mrb[0].mxu0
      %1254 = vmatprep.mubr.bf16.mxu0 0
      %1255 = vmatmul.mubr.bf16.gmra.mrb[0].mxu0 %v1102
      %v1256 = vpop.f32.mrb[0].mxu0
      %v1257 = vadd.f32 0.0, %v1256
      %v1258 = vpop.f32.mrb[0].mxu0
      %v1259 = vpop.f32.mrb[0].mxu0
      %v1260 = vadd.f32 0.0, %v1259
      %v1261 = vpop.f32.mrb[0].mxu0
      %1262 = vmatprep.mubr.bf16.mxu0 0
      %1263 = vmatmul.mubr.bf16.gmra.mrb[0].mxu0 %v1105
      %v1264 = vpop.f32.mrb[0].mxu0
      %v1265 = vadd.f32 0.0, %v1264
      %v1266 = vpop.f32.mrb[0].mxu0
      %v1267 = vpop.f32.mrb[0].mxu0
      %v1268 = vadd.f32 0.0, %v1267
      %v1269 = vpop.f32.mrb[0].mxu0
      %1270 = vdwg.mxu0
      %v1271 = vld [vmem:[#allocation2] sm:$0xff]
      %v1272 = vld [vmem:[#allocation2 + $0x8] sm:$0xff]
      %v1273 = vld [vmem:[#allocation2 + $0x10] sm:$0xff]
      %v1274 = vld [vmem:[#allocation2 + $0x18] sm:$0xff]
      %v1275 = vld [vmem:[#allocation2 + $0x20] sm:$0xff]
      %v1276 = vld [vmem:[#allocation2 + $0x28] sm:$0xff]
      %v1277 = vld [vmem:[#allocation2 + $0x30] sm:$0xff]
      %v1278 = vld [vmem:[#allocation2 + $0x38] sm:$0xff]
      %v1279 = vld [vmem:[#allocation2 + $0x40] sm:$0xff]
      %v1280 = vld [vmem:[#allocation2 + $0x48] sm:$0xff]
      %v1281 = vld [vmem:[#allocation2 + $0x50] sm:$0xff]
      %v1282 = vld [vmem:[#allocation2 + $0x58] sm:$0xff]
      %v1283 = vld [vmem:[#allocation2 + $0x60] sm:$0xff]
      %v1284 = vld [vmem:[#allocation2 + $0x68] sm:$0xff]
      %v1285 = vld [vmem:[#allocation2 + $0x70] sm:$0xff]
      %v1286 = vld [vmem:[#allocation2 + $0x78] sm:$0xff]
      %v1287 = vld [vmem:[#allocation2 + $0x80] sm:$0xff]
      %v1288 = vld [vmem:[#allocation2 + $0x88] sm:$0xff]
      %v1289 = vld [vmem:[#allocation2 + $0x90] sm:$0xff]
      %v1290 = vld [vmem:[#allocation2 + $0x98] sm:$0xff]
      %v1291 = vld [vmem:[#allocation2 + $0xa0] sm:$0xff]
      %v1292 = vld [vmem:[#allocation2 + $0xa8] sm:$0xff]
      %v1293 = vld [vmem:[#allocation2 + $0xb0] sm:$0xff]
      %v1294 = vld [vmem:[#allocation2 + $0xb8] sm:$0xff]
      %v1295 = vld [vmem:[#allocation2 + $0xc0] sm:$0xff]
      %v1296 = vld [vmem:[#allocation2 + $0xc8] sm:$0xff]
      %v1297 = vld [vmem:[#allocation2 + $0xd0] sm:$0xff]
      %v1298 = vld [vmem:[#allocation2 + $0xd8] sm:$0xff]
      %v1299 = vld [vmem:[#allocation2 + $0xe0] sm:$0xff]
      %v1300 = vld [vmem:[#allocation2 + $0xe8] sm:$0xff]
      %v1301 = vld [vmem:[#allocation2 + $0xf0] sm:$0xff]
      %v1302 = vld [vmem:[#allocation2 + $0xf8] sm:$0xff]
      %v1303 = vadd.f32 %v1271, %v1145
      %v1304 = vadd.f32 %v1272, %v1148
      %v1305 = vadd.f32 %v1273, %v1153
      %v1306 = vadd.f32 %v1274, %v1156
      %v1307 = vadd.f32 %v1275, %v1161
      %v1308 = vadd.f32 %v1276, %v1164
      %v1309 = vadd.f32 %v1277, %v1169
      %v1310 = vadd.f32 %v1278, %v1172
      %v1311 = vadd.f32 %v1279, %v1177
      %v1312 = vadd.f32 %v1280, %v1180
      %v1313 = vadd.f32 %v1281, %v1185
      %v1314 = vadd.f32 %v1282, %v1188
      %v1315 = vadd.f32 %v1283, %v1193
      %v1316 = vadd.f32 %v1284, %v1196
      %v1317 = vadd.f32 %v1285, %v1201
      %v1318 = vadd.f32 %v1286, %v1204
      %v1319 = vadd.f32 %v1287, %v1209
      %v1320 = vadd.f32 %v1288, %v1212
      %v1321 = vadd.f32 %v1289, %v1217
      %v1322 = vadd.f32 %v1290, %v1220
      %v1323 = vadd.f32 %v1291, %v1225
      %v1324 = vadd.f32 %v1292, %v1228
      %v1325 = vadd.f32 %v1293, %v1233
      %v1326 = vadd.f32 %v1294, %v1236
      %v1327 = vadd.f32 %v1295, %v1241
      %v1328 = vadd.f32 %v1296, %v1244
      %v1329 = vadd.f32 %v1297, %v1249
      %v1330 = vadd.f32 %v1298, %v1252
      %v1331 = vadd.f32 %v1299, %v1257
      %v1332 = vadd.f32 %v1300, %v1260
      %v1333 = vadd.f32 %v1301, %v1265
      %v1334 = vadd.f32 %v1302, %v1268
      %1335 = vst.msk [vmem:[#allocation2] sm:$0xff] %vm478, %v1303
      %1336 = vst.msk [vmem:[#allocation2 + $0x8] sm:$0xff] %vm478, %v1304
      %1337 = vst.msk [vmem:[#allocation2 + $0x10] sm:$0xff] %vm478, %v1305
      %1338 = vst.msk [vmem:[#allocation2 + $0x18] sm:$0xff] %vm478, %v1306
      %1339 = vst.msk [vmem:[#allocation2 + $0x20] sm:$0xff] %vm478, %v1307
      %1340 = vst.msk [vmem:[#allocation2 + $0x28] sm:$0xff] %vm478, %v1308
      %1341 = vst.msk [vmem:[#allocation2 + $0x30] sm:$0xff] %vm478, %v1309
      %1342 = vst.msk [vmem:[#allocation2 + $0x38] sm:$0xff] %vm478, %v1310
      %1343 = vst.msk [vmem:[#allocation2 + $0x40] sm:$0xff] %vm478, %v1311
      %1344 = vst.msk [vmem:[#allocation2 + $0x48] sm:$0xff] %vm478, %v1312
      %1345 = vst.msk [vmem:[#allocation2 + $0x50] sm:$0xff] %vm478, %v1313
      %1346 = vst.msk [vmem:[#allocation2 + $0x58] sm:$0xff] %vm478, %v1314
      %1347 = vst.msk [vmem:[#allocation2 + $0x60] sm:$0xff] %vm478, %v1315
      %1348 = vst.msk [vmem:[#allocation2 + $0x68] sm:$0xff] %vm478, %v1316
      %1349 = vst.msk [vmem:[#allocation2 + $0x70] sm:$0xff] %vm478, %v1317
      %1350 = vst.msk [vmem:[#allocation2 + $0x78] sm:$0xff] %vm478, %v1318
      %1351 = vst.msk [vmem:[#allocation2 + $0x80] sm:$0xff] %vm478, %v1319
      %1352 = vst.msk [vmem:[#allocation2 + $0x88] sm:$0xff] %vm478, %v1320
      %1353 = vst.msk [vmem:[#allocation2 + $0x90] sm:$0xff] %vm478, %v1321
      %1354 = vst.msk [vmem:[#allocation2 + $0x98] sm:$0xff] %vm478, %v1322
      %1355 = vst.msk [vmem:[#allocation2 + $0xa0] sm:$0xff] %vm478, %v1323
      %1356 = vst.msk [vmem:[#allocation2 + $0xa8] sm:$0xff] %vm478, %v1324
      %1357 = vst.msk [vmem:[#allocation2 + $0xb0] sm:$0xff] %vm478, %v1325
      %1358 = vst.msk [vmem:[#allocation2 + $0xb8] sm:$0xff] %vm478, %v1326
      %1359 = vst.msk [vmem:[#allocation2 + $0xc0] sm:$0xff] %vm478, %v1327
      %1360 = vst.msk [vmem:[#allocation2 + $0xc8] sm:$0xff] %vm478, %v1328
      %1361 = vst.msk [vmem:[#allocation2 + $0xd0] sm:$0xff] %vm478, %v1329
      %1362 = vst.msk [vmem:[#allocation2 + $0xd8] sm:$0xff] %vm478, %v1330
      %1363 = vst.msk [vmem:[#allocation2 + $0xe0] sm:$0xff] %vm478, %v1331
      %1364 = vst.msk [vmem:[#allocation2 + $0xe8] sm:$0xff] %vm478, %v1332
      %1365 = vst.msk [vmem:[#allocation2 + $0xf0] sm:$0xff] %vm478, %v1333
      %1366 = vst.msk [vmem:[#allocation2 + $0xf8] sm:$0xff] %vm478, %v1334
      %v1367 = vld [vmem:[#allocation2] sm:$0xff]
      %v1368 = vld [vmem:[#allocation2 + $0x8] sm:$0xff]
      %v1369 = vld [vmem:[#allocation2 + $0x10] sm:$0xff]
      %v1370 = vld [vmem:[#allocation2 + $0x18] sm:$0xff]
      %v1371 = vld [vmem:[#allocation2 + $0x20] sm:$0xff]
      %v1372 = vld [vmem:[#allocation2 + $0x28] sm:$0xff]
      %v1373 = vld [vmem:[#allocation2 + $0x30] sm:$0xff]
      %v1374 = vld [vmem:[#allocation2 + $0x38] sm:$0xff]
      %v1375 = vld [vmem:[#allocation2 + $0x40] sm:$0xff]
      %v1376 = vld [vmem:[#allocation2 + $0x48] sm:$0xff]
      %v1377 = vld [vmem:[#allocation2 + $0x50] sm:$0xff]
      %v1378 = vld [vmem:[#allocation2 + $0x58] sm:$0xff]
      %v1379 = vld [vmem:[#allocation2 + $0x60] sm:$0xff]
      %v1380 = vld [vmem:[#allocation2 + $0x68] sm:$0xff]
      %v1381 = vld [vmem:[#allocation2 + $0x70] sm:$0xff]
      %v1382 = vld [vmem:[#allocation2 + $0x78] sm:$0xff]
      %v1383 = vld [vmem:[#allocation2 + $0x80] sm:$0xff]
      %v1384 = vld [vmem:[#allocation2 + $0x88] sm:$0xff]
      %v1385 = vld [vmem:[#allocation2 + $0x90] sm:$0xff]
      %v1386 = vld [vmem:[#allocation2 + $0x98] sm:$0xff]
      %v1387 = vld [vmem:[#allocation2 + $0xa0] sm:$0xff]
      %v1388 = vld [vmem:[#allocation2 + $0xa8] sm:$0xff]
      %v1389 = vld [vmem:[#allocation2 + $0xb0] sm:$0xff]
      %v1390 = vld [vmem:[#allocation2 + $0xb8] sm:$0xff]
      %v1391 = vld [vmem:[#allocation2 + $0xc0] sm:$0xff]
      %v1392 = vld [vmem:[#allocation2 + $0xc8] sm:$0xff]
      %v1393 = vld [vmem:[#allocation2 + $0xd0] sm:$0xff]
      %v1394 = vld [vmem:[#allocation2 + $0xd8] sm:$0xff]
      %v1395 = vld [vmem:[#allocation2 + $0xe0] sm:$0xff]
      %v1396 = vld [vmem:[#allocation2 + $0xe8] sm:$0xff]
      %v1397 = vld [vmem:[#allocation2 + $0xf0] sm:$0xff]
      %v1398 = vld [vmem:[#allocation2 + $0xf8] sm:$0xff]
      %v1399 = vsel %vm478, %v1367, 0.0
      %v1400 = vsel %vm478, %v1368, 0.0
      %v1401 = vadd.f32 %v1399, %v1400
      %v1402 = vsel %vm478, %v1369, 0.0
      %v1403 = vadd.f32 %v1401, %v1402
      %v1404 = vsel %vm478, %v1370, 0.0
      %v1405 = vadd.f32 %v1403, %v1404
      %v1406 = vsel %vm478, %v1371, 0.0
      %v1407 = vadd.f32 %v1405, %v1406
      %v1408 = vsel %vm478, %v1372, 0.0
      %v1409 = vadd.f32 %v1407, %v1408
      %v1410 = vsel %vm478, %v1373, 0.0
      %v1411 = vadd.f32 %v1409, %v1410
      %v1412 = vsel %vm478, %v1374, 0.0
      %v1413 = vadd.f32 %v1411, %v1412
      %v1414 = vsel %vm478, %v1375, 0.0
      %v1415 = vadd.f32 %v1413, %v1414
      %v1416 = vsel %vm478, %v1376, 0.0
      %v1417 = vadd.f32 %v1415, %v1416
      %v1418 = vsel %vm478, %v1377, 0.0
      %v1419 = vadd.f32 %v1417, %v1418
      %v1420 = vsel %vm478, %v1378, 0.0
      %v1421 = vadd.f32 %v1419, %v1420
      %v1422 = vsel %vm478, %v1379, 0.0
      %v1423 = vadd.f32 %v1421, %v1422
      %v1424 = vsel %vm478, %v1380, 0.0
      %v1425 = vadd.f32 %v1423, %v1424
      %v1426 = vsel %vm478, %v1381, 0.0
      %v1427 = vadd.f32 %v1425, %v1426
      %v1428 = vsel %vm478, %v1382, 0.0
      %v1429 = vadd.f32 %v1427, %v1428
      %v1430 = vsel %vm478, %v1383, 0.0
      %v1431 = vadd.f32 %v1429, %v1430
      %v1432 = vsel %vm478, %v1384, 0.0
      %v1433 = vadd.f32 %v1431, %v1432
      %v1434 = vsel %vm478, %v1385, 0.0
      %v1435 = vadd.f32 %v1433, %v1434
      %v1436 = vsel %vm478, %v1386, 0.0
      %v1437 = vadd.f32 %v1435, %v1436
      %v1438 = vsel %vm478, %v1387, 0.0
      %v1439 = vadd.f32 %v1437, %v1438
      %v1440 = vsel %vm478, %v1388, 0.0
      %v1441 = vadd.f32 %v1439, %v1440
      %v1442 = vsel %vm478, %v1389, 0.0
      %v1443 = vadd.f32 %v1441, %v1442
      %v1444 = vsel %vm478, %v1390, 0.0
      %v1445 = vadd.f32 %v1443, %v1444
      %v1446 = vsel %vm478, %v1391, 0.0
      %v1447 = vadd.f32 %v1445, %v1446
      %v1448 = vsel %vm478, %v1392, 0.0
      %v1449 = vadd.f32 %v1447, %v1448
      %v1450 = vsel %vm478, %v1393, 0.0
      %v1451 = vadd.f32 %v1449, %v1450
      %v1452 = vsel %vm478, %v1394, 0.0
      %v1453 = vadd.f32 %v1451, %v1452
      %v1454 = vsel %vm478, %v1395, 0.0
      %v1455 = vadd.f32 %v1453, %v1454
      %v1456 = vsel %vm478, %v1396, 0.0
      %v1457 = vadd.f32 %v1455, %v1456
      %v1458 = vsel %vm478, %v1397, 0.0
      %v1459 = vadd.f32 %v1457, %v1458
      %v1460 = vsel %vm478, %v1398, 0.0
      %v1461 = vadd.f32 %v1459, %v1460
      %v1462 = vrot.slane %v1461, 4
      %v1463 = vadd.f32 %v1461, %v1462
      %v1464 = vrot.slane %v1463, 2
      %v1465 = vadd.f32 %v1463, %v1464
      %v1466 = vrot.slane %v1465, 1
      %v1467 = vadd.f32 %v1465, %v1466
      %v1468 = vmul.f32 %v1467, 0.00390625
      %v1469 = vmul.f32 %v1367, %v1367
      %v1470 = vmul.f32 %v1368, %v1368
      %v1471 = vmul.f32 %v1369, %v1369
      %v1472 = vmul.f32 %v1370, %v1370
      %v1473 = vmul.f32 %v1371, %v1371
      %v1474 = vmul.f32 %v1372, %v1372
      %v1475 = vmul.f32 %v1373, %v1373
      %v1476 = vmul.f32 %v1374, %v1374
      %v1477 = vmul.f32 %v1375, %v1375
      %v1478 = vmul.f32 %v1376, %v1376
      %v1479 = vmul.f32 %v1377, %v1377
      %v1480 = vmul.f32 %v1378, %v1378
      %v1481 = vmul.f32 %v1379, %v1379
      %v1482 = vmul.f32 %v1380, %v1380
      %v1483 = vmul.f32 %v1381, %v1381
      %v1484 = vmul.f32 %v1382, %v1382
      %v1485 = vmul.f32 %v1383, %v1383
      %v1486 = vmul.f32 %v1384, %v1384
      %v1487 = vmul.f32 %v1385, %v1385
      %v1488 = vmul.f32 %v1386, %v1386
      %v1489 = vmul.f32 %v1387, %v1387
      %v1490 = vmul.f32 %v1388, %v1388
      %v1491 = vmul.f32 %v1389, %v1389
      %v1492 = vmul.f32 %v1390, %v1390
      %v1493 = vmul.f32 %v1391, %v1391
      %v1494 = vmul.f32 %v1392, %v1392
      %v1495 = vmul.f32 %v1393, %v1393
      %v1496 = vmul.f32 %v1394, %v1394
      %v1497 = vmul.f32 %v1395, %v1395
      %v1498 = vmul.f32 %v1396, %v1396
      %v1499 = vmul.f32 %v1397, %v1397
      %v1500 = vmul.f32 %v1398, %v1398
      %v1501 = vsel %vm478, %v1469, 0.0
      %v1502 = vsel %vm478, %v1470, 0.0
      %v1503 = vadd.f32 %v1501, %v1502
      %v1504 = vsel %vm478, %v1471, 0.0
      %v1505 = vadd.f32 %v1503, %v1504
      %v1506 = vsel %vm478, %v1472, 0.0
      %v1507 = vadd.f32 %v1505, %v1506
      %v1508 = vsel %vm478, %v1473, 0.0
      %v1509 = vadd.f32 %v1507, %v1508
      %v1510 = vsel %vm478, %v1474, 0.0
      %v1511 = vadd.f32 %v1509, %v1510
      %v1512 = vsel %vm478, %v1475, 0.0
      %v1513 = vadd.f32 %v1511, %v1512
      %v1514 = vsel %vm478, %v1476, 0.0
      %v1515 = vadd.f32 %v1513, %v1514
      %v1516 = vsel %vm478, %v1477, 0.0
      %v1517 = vadd.f32 %v1515, %v1516
      %v1518 = vsel %vm478, %v1478, 0.0
      %v1519 = vadd.f32 %v1517, %v1518
      %v1520 = vsel %vm478, %v1479, 0.0
      %v1521 = vadd.f32 %v1519, %v1520
      %v1522 = vsel %vm478, %v1480, 0.0
      %v1523 = vadd.f32 %v1521, %v1522
      %v1524 = vsel %vm478, %v1481, 0.0
      %v1525 = vadd.f32 %v1523, %v1524
      %v1526 = vsel %vm478, %v1482, 0.0
      %v1527 = vadd.f32 %v1525, %v1526
      %v1528 = vsel %vm478, %v1483, 0.0
      %v1529 = vadd.f32 %v1527, %v1528
      %v1530 = vsel %vm478, %v1484, 0.0
      %v1531 = vadd.f32 %v1529, %v1530
      %v1532 = vsel %vm478, %v1485, 0.0
      %v1533 = vadd.f32 %v1531, %v1532
      %v1534 = vsel %vm478, %v1486, 0.0
      %v1535 = vadd.f32 %v1533, %v1534
      %v1536 = vsel %vm478, %v1487, 0.0
      %v1537 = vadd.f32 %v1535, %v1536
      %v1538 = vsel %vm478, %v1488, 0.0
      %v1539 = vadd.f32 %v1537, %v1538
      %v1540 = vsel %vm478, %v1489, 0.0
      %v1541 = vadd.f32 %v1539, %v1540
      %v1542 = vsel %vm478, %v1490, 0.0
      %v1543 = vadd.f32 %v1541, %v1542
      %v1544 = vsel %vm478, %v1491, 0.0
      %v1545 = vadd.f32 %v1543, %v1544
      %v1546 = vsel %vm478, %v1492, 0.0
      %v1547 = vadd.f32 %v1545, %v1546
      %v1548 = vsel %vm478, %v1493, 0.0
      %v1549 = vadd.f32 %v1547, %v1548
      %v1550 = vsel %vm478, %v1494, 0.0
      %v1551 = vadd.f32 %v1549, %v1550
      %v1552 = vsel %vm478, %v1495, 0.0
      %v1553 = vadd.f32 %v1551, %v1552
      %v1554 = vsel %vm478, %v1496, 0.0
      %v1555 = vadd.f32 %v1553, %v1554
      %v1556 = vsel %vm478, %v1497, 0.0
      %v1557 = vadd.f32 %v1555, %v1556
      %v1558 = vsel %vm478, %v1498, 0.0
      %v1559 = vadd.f32 %v1557, %v1558
      %v1560 = vsel %vm478, %v1499, 0.0
      %v1561 = vadd.f32 %v1559, %v1560
      %v1562 = vsel %vm478, %v1500, 0.0
      %v1563 = vadd.f32 %v1561, %v1562
      %v1564 = vrot.slane %v1563, 4
      %v1565 = vadd.f32 %v1563, %v1564
      %v1566 = vrot.slane %v1565, 2
      %v1567 = vadd.f32 %v1565, %v1566
      %v1568 = vrot.slane %v1567, 1
      %v1569 = vadd.f32 %v1567, %v1568
      %v1570 = vmul.f32 %v1569, 0.00390625
      %v1571 = vmul.f32 %v1468, %v1468
      %v1572 = vsub.f32 %v1570, %v1571
      %v1573 = vmax.f32 %v1572, 0.0
      %v1574 = vadd.f32 %v1573, 1e-05
      %v1575 = vrsqrt.pop %v1574
      %v1576 = vsub.f32 %v1367, %v1468
      %v1577 = vsub.f32 %v1368, %v1468
      %v1578 = vsub.f32 %v1369, %v1468
      %v1579 = vsub.f32 %v1370, %v1468
      %v1580 = vsub.f32 %v1371, %v1468
      %v1581 = vsub.f32 %v1372, %v1468
      %v1582 = vsub.f32 %v1373, %v1468
      %v1583 = vsub.f32 %v1374, %v1468
      %v1584 = vsub.f32 %v1375, %v1468
      %v1585 = vsub.f32 %v1376, %v1468
      %v1586 = vsub.f32 %v1377, %v1468
      %v1587 = vsub.f32 %v1378, %v1468
      %v1588 = vsub.f32 %v1379, %v1468
      %v1589 = vsub.f32 %v1380, %v1468
      %v1590 = vsub.f32 %v1381, %v1468
      %v1591 = vsub.f32 %v1382, %v1468
      %v1592 = vsub.f32 %v1383, %v1468
      %v1593 = vsub.f32 %v1384, %v1468
      %v1594 = vsub.f32 %v1385, %v1468
      %v1595 = vsub.f32 %v1386, %v1468
      %v1596 = vsub.f32 %v1387, %v1468
      %v1597 = vsub.f32 %v1388, %v1468
      %v1598 = vsub.f32 %v1389, %v1468
      %v1599 = vsub.f32 %v1390, %v1468
      %v1600 = vsub.f32 %v1391, %v1468
      %v1601 = vsub.f32 %v1392, %v1468
      %v1602 = vsub.f32 %v1393, %v1468
      %v1603 = vsub.f32 %v1394, %v1468
      %v1604 = vsub.f32 %v1395, %v1468
      %v1605 = vsub.f32 %v1396, %v1468
      %v1606 = vsub.f32 %v1397, %v1468
      %v1607 = vsub.f32 %v1398, %v1468
      %v1608 = vmul.f32 %v1576, %v1575
      %v1609 = vmul.f32 %v1577, %v1575
      %v1610 = vmul.f32 %v1578, %v1575
      %v1611 = vmul.f32 %v1579, %v1575
      %v1612 = vmul.f32 %v1580, %v1575
      %v1613 = vmul.f32 %v1581, %v1575
      %v1614 = vmul.f32 %v1582, %v1575
      %v1615 = vmul.f32 %v1583, %v1575
      %v1616 = vmul.f32 %v1584, %v1575
      %v1617 = vmul.f32 %v1585, %v1575
      %v1618 = vmul.f32 %v1586, %v1575
      %v1619 = vmul.f32 %v1587, %v1575
      %v1620 = vmul.f32 %v1588, %v1575
      %v1621 = vmul.f32 %v1589, %v1575
      %v1622 = vmul.f32 %v1590, %v1575
      %v1623 = vmul.f32 %v1591, %v1575
      %v1624 = vmul.f32 %v1592, %v1575
      %v1625 = vmul.f32 %v1593, %v1575
      %v1626 = vmul.f32 %v1594, %v1575
      %v1627 = vmul.f32 %v1595, %v1575
      %v1628 = vmul.f32 %v1596, %v1575
      %v1629 = vmul.f32 %v1597, %v1575
      %v1630 = vmul.f32 %v1598, %v1575
      %v1631 = vmul.f32 %v1599, %v1575
      %v1632 = vmul.f32 %v1600, %v1575
      %v1633 = vmul.f32 %v1601, %v1575
      %v1634 = vmul.f32 %v1602, %v1575
      %v1635 = vmul.f32 %v1603, %v1575
      %v1636 = vmul.f32 %v1604, %v1575
      %v1637 = vmul.f32 %v1605, %v1575
      %v1638 = vmul.f32 %v1606, %v1575
      %v1639 = vmul.f32 %v1607, %v1575
      %v1640 = vmax.f32 %v1608, 0.0
      %v1641 = vmax.f32 %v1609, 0.0
      %v1642 = vmax.f32 %v1610, 0.0
      %v1643 = vmax.f32 %v1611, 0.0
      %v1644 = vmax.f32 %v1612, 0.0
      %v1645 = vmax.f32 %v1613, 0.0
      %v1646 = vmax.f32 %v1614, 0.0
      %v1647 = vmax.f32 %v1615, 0.0
      %v1648 = vmax.f32 %v1616, 0.0
      %v1649 = vmax.f32 %v1617, 0.0
      %v1650 = vmax.f32 %v1618, 0.0
      %v1651 = vmax.f32 %v1619, 0.0
      %v1652 = vmax.f32 %v1620, 0.0
      %v1653 = vmax.f32 %v1621, 0.0
      %v1654 = vmax.f32 %v1622, 0.0
      %v1655 = vmax.f32 %v1623, 0.0
      %v1656 = vmax.f32 %v1624, 0.0
      %v1657 = vmax.f32 %v1625, 0.0
      %v1658 = vmax.f32 %v1626, 0.0
      %v1659 = vmax.f32 %v1627, 0.0
      %v1660 = vmax.f32 %v1628, 0.0
      %v1661 = vmax.f32 %v1629, 0.0
      %v1662 = vmax.f32 %v1630, 0.0
      %v1663 = vmax.f32 %v1631, 0.0
      %v1664 = vmax.f32 %v1632, 0.0
      %v1665 = vmax.f32 %v1633, 0.0
      %v1666 = vmax.f32 %v1634, 0.0
      %v1667 = vmax.f32 %v1635, 0.0
      %v1668 = vmax.f32 %v1636, 0.0
      %v1669 = vmax.f32 %v1637, 0.0
      %v1670 = vmax.f32 %v1638, 0.0
      %v1671 = vmax.f32 %v1639, 0.0
      %1672 = vst.msk [vmem:[%s143] sm:$0xff] %vm478, %v1640
      %1673 = vst.msk [vmem:[%s143 + $0x8] sm:$0xff] %vm478, %v1641
      %1674 = vst.msk [vmem:[%s143 + $0x10] sm:$0xff] %vm478, %v1642
      %1675 = vst.msk [vmem:[%s143 + $0x18] sm:$0xff] %vm478, %v1643
      %1676 = vst.msk [vmem:[%s143 + $0x20] sm:$0xff] %vm478, %v1644
      %1677 = vst.msk [vmem:[%s143 + $0x28] sm:$0xff] %vm478, %v1645
      %1678 = vst.msk [vmem:[%s143 + $0x30] sm:$0xff] %vm478, %v1646
      %1679 = vst.msk [vmem:[%s143 + $0x38] sm:$0xff] %vm478, %v1647
      %1680 = vst.msk [vmem:[%s143 + $0x40] sm:$0xff] %vm478, %v1648
      %1681 = vst.msk [vmem:[%s143 + $0x48] sm:$0xff] %vm478, %v1649
      %1682 = vst.msk [vmem:[%s143 + $0x50] sm:$0xff] %vm478, %v1650
      %1683 = vst.msk [vmem:[%s143 + $0x58] sm:$0xff] %vm478, %v1651
      %1684 = vst.msk [vmem:[%s143 + $0x60] sm:$0xff] %vm478, %v1652
      %1685 = vst.msk [vmem:[%s143 + $0x68] sm:$0xff] %vm478, %v1653
      %1686 = vst.msk [vmem:[%s143 + $0x70] sm:$0xff] %vm478, %v1654
      %1687 = vst.msk [vmem:[%s143 + $0x78] sm:$0xff] %vm478, %v1655
      %1688 = vst.msk [vmem:[%s143 + $0x80] sm:$0xff] %vm478, %v1656
      %1689 = vst.msk [vmem:[%s143 + $0x88] sm:$0xff] %vm478, %v1657
      %1690 = vst.msk [vmem:[%s143 + $0x90] sm:$0xff] %vm478, %v1658
      %1691 = vst.msk [vmem:[%s143 + $0x98] sm:$0xff] %vm478, %v1659
      %1692 = vst.msk [vmem:[%s143 + $0xa0] sm:$0xff] %vm478, %v1660
      %1693 = vst.msk [vmem:[%s143 + $0xa8] sm:$0xff] %vm478, %v1661
      %1694 = vst.msk [vmem:[%s143 + $0xb0] sm:$0xff] %vm478, %v1662
      %1695 = vst.msk [vmem:[%s143 + $0xb8] sm:$0xff] %vm478, %v1663
      %1696 = vst.msk [vmem:[%s143 + $0xc0] sm:$0xff] %vm478, %v1664
      %1697 = vst.msk [vmem:[%s143 + $0xc8] sm:$0xff] %vm478, %v1665
      %1698 = vst.msk [vmem:[%s143 + $0xd0] sm:$0xff] %vm478, %v1666
      %1699 = vst.msk [vmem:[%s143 + $0xd8] sm:$0xff] %vm478, %v1667
      %1700 = vst.msk [vmem:[%s143 + $0xe0] sm:$0xff] %vm478, %v1668
      %1701 = vst.msk [vmem:[%s143 + $0xe8] sm:$0xff] %vm478, %v1669
      %1702 = vst.msk [vmem:[%s143 + $0xf0] sm:$0xff] %vm478, %v1670
      %1703 = vst.msk [vmem:[%s143 + $0xf8] sm:$0xff] %vm478, %v1671
      %p1704 = scmp.lt.s32.totalorder %s13, 1
      %s1705 = scalar_select %p1704, %s13, 1
      %s1706 = smul.addr %s1705, 32
      %s1707 = smul.addr %s1706, 8
      %s1708 = scalar_lea.vmem %s2, %s1707
      // Predicated region
      $region29: #{tpu_custom_call.1} parent=27 // pred_check
        %p1709 = pneg %p78
      $region30: #{tpu_custom_call.1} parent=27 // pred_check_branch
        %1711 = sbr.rel (%p1709) target = $region32
      $region31: #{tpu_custom_call.1} parent=27 // pred_region
        _
      $region32: #{tpu_custom_call.1} parent=27 // pred_fallthru
        _
    $region28: #{tpu_custom_call.1} parent=5 // pred_fallthru
      _
    %p1712 = scmp.le.s32.totalorder 2, %s8
    // Predicated region
    $region33: #{tpu_custom_call.1} parent=5 // pred_check
      %p1713 = pneg %p1712
    $region34: #{tpu_custom_call.1} parent=5 // pred_check_branch
      %1715 = sbr.rel (%p1713) target = $region36
    $region35: #{tpu_custom_call.1} parent=5 // pred_region
      %s1716 = ssub.s32 %s8, 2
      // Predicated region
      $region37: #{tpu_custom_call.1} parent=35 // pred_check
        %p1717 = pneg %p84
      $region38: #{tpu_custom_call.1} parent=35 // pred_check_branch
        %1719 = sbr.rel (%p1717) target = $region40
      $region39: #{tpu_custom_call.1} parent=35 // pred_region
        %p1720 = scmp.lt.s32.totalorder %s14, 1
        %s1721 = scalar_select %p1720, %s14, 1
        %s1722 = smul.addr %s1721, 32
        %s1723 = smul.addr %s1722, 8
        %s1724 = scalar_lea.vmem %s2, %s1723
      $region40: #{tpu_custom_call.1} parent=35 // pred_fallthru
        _
    $region36: #{tpu_custom_call.1} parent=5 // pred_fallthru
      _
  $region6: #{tpu_custom_call.1} parent=0 // loop_footer
    %s12 = sadd.s32 1, %s8
  $region7: #{tpu_custom_call.1} parent=0 // loop_footer_branch
    %7 = sbr.rel target = $region3
  $region8: #{tpu_custom_call.1} parent=0 // loop_exit
    _

</llo_original>
